<compile_context>
chip_gen: v5e
topology: v5e:2x2
jax: 0.10.0
libtpu: 0.0.40
codegen_flags: <defaults>
</compile_context>

<pallas_src>
import functools

import numpy as np
import jax
import jax.numpy as jnp
from jax.experimental import pallas as pl
from jax.experimental.pallas import tpu as pltpu


def _round_up(x, m):
    return ((x + m - 1) // m) * m


# ----------------------------------------------------------------------------
# Pallas kernels
# ----------------------------------------------------------------------------

def _feat_kernel(y_ref, we_ref, wd_ref, o_ref):
    """Fused encoder+decoder stand-in: two 1x1 convs + ReLU, channel-first.

    y_ref:  [1, Cin, TILE_S] f32     we_ref: [64, Cin] bf16
    wd_ref: [64, 64] bf16            o_ref:  [1, 64, TILE_S] bf16
    """
    y = y_ref[0].astype(jnp.bfloat16)                                  # [Cin, S]
    e = jnp.dot(we_ref[...], y, preferred_element_type=jnp.float32)    # [64, S]
    e = jnp.maximum(e, 0.0).astype(jnp.bfloat16)
    d = jnp.dot(wd_ref[...], e, preferred_element_type=jnp.float32)    # [64, S]
    o_ref[0] = jnp.maximum(d, 0.0).astype(jnp.bfloat16)


def _refine_kernel(feat_ref, w0_ref, b0_ref, wk_ref, b1_ref, w2_ref, b2_ref,
                   dwm_ref, o_ref, *, w):
    """Refine head, fully in the flat channel-first [C, h*w] layout.

    feat_ref: [1, 64, hw_p] bf16      w0_ref: [32, 64] bf16   b0_ref: [32, 1] f32
    wk_ref:   [9, 32, 1]  f32 (DW taps, BN1-folded)           b1_ref: [32, 1] f32
    w2_ref:   [3, 32]     bf16                                b2_ref: [3, 1]  f32
    dwm_ref:  [9, 1, hw_p] f32 (per-tap boundary masks, zero in the padding)
    o_ref:    [1, 3, hw_p] f32
    """
    feat = feat_ref[0]                                                 # [64, hw_p]
    hw_p = feat.shape[1]

    # --- 1x1 conv 64->32 (+ folded BN0) + ReLU : bf16 MXU, f32 accumulate ---
    a = jnp.dot(w0_ref[...], feat, preferred_element_type=jnp.float32)  # [32, hw_p]
    a = jnp.maximum(a + b0_ref[...], 0.0)

    # --- depthwise 3x3, pad=1, groups=32 --------------------------------
    # A spatial shift (dy, dx) on the row-major flat layout is a flat roll by
    # dy*w + dx; zero padding / row-crossing is handled by precomputed masks.
    # pltpu.roll follows jnp.roll semantics: out[p] = in[(p - shift) mod n].
    acc = jnp.zeros_like(a)
    for dy in (-1, 0, 1):
        for dx in (-1, 0, 1):
            k = (dy + 1) * 3 + (dx + 1)
            shift = (-(dy * w + dx)) % hw_p
            rolled = pltpu.roll(a, shift=shift, axis=1) if shift else a
            acc = acc + rolled * dwm_ref[k] * wk_ref[k]
    d = jnp.maximum(acc + b1_ref[...], 0.0)                            # [32, hw_p]

    # --- 1x1 conv 32->3 (+ folded BN2) ---------------------------------
    img = jnp.dot(w2_ref[...], d.astype(jnp.bfloat16),
                  preferred_element_type=jnp.float32) + b2_ref[...]    # [3, hw_p]
    o_ref[0] = img


def _resize_add_kernel(img_ref, ry_ref, cxt_ref, x_ref, o_ref):
    """Bilinear resize (align_corners=True) as two matmuls + residual add.

    img_ref: [1, 3, h, w] f32   ry_ref: [H, h] f32   cxt_ref: [w, W] f32
    x_ref / o_ref: [1, 3, H, W] f32
    """
    for c in range(3):
        t = jnp.dot(img_ref[0, c], cxt_ref[...],
                    preferred_element_type=jnp.float32)                # [h, W]
        oc = jnp.dot(ry_ref[...], t, preferred_element_type=jnp.float32)  # [H, W]
        o_ref[0, c] = oc + x_ref[0, c]


# ----------------------------------------------------------------------------
# Host-side constant builders
# ----------------------------------------------------------------------------

def _interp_matrix(out_size, in_size):
    """Row-interpolation matrix for bilinear resize with align_corners=True."""
    m = np.zeros((out_size, in_size), np.float32)
    if in_size == 1:
        m[:, 0] = 1.0
        return m
    scale = (in_size - 1) / (out_size - 1) if out_size > 1 else 0.0
    src = np.arange(out_size, dtype=np.float64) * scale
    i0 = np.clip(np.floor(src).astype(np.int64), 0, in_size - 1)
    i1 = np.minimum(i0 + 1, in_size - 1)
    w1 = (src - i0).astype(np.float32)
    w0 = 1.0 - w1
    m[np.arange(out_size), i0] += w0
    m[np.arange(out_size), i1] += w1
    return m


def _dw_masks(h, w, hw_p):
    """[9, 1, hw_p] validity masks for the flat-roll depthwise 3x3 conv."""
    yy, xx = np.meshgrid(np.arange(h), np.arange(w), indexing="ij")
    masks = np.zeros((9, 1, hw_p), np.float32)
    for dy in (-1, 0, 1):
        for dx in (-1, 0, 1):
            valid = ((yy + dy >= 0) & (yy + dy < h) &
                     (xx + dx >= 0) & (xx + dx < w)).astype(np.float32)
            masks[(dy + 1) * 3 + (dx + 1), 0, :h * w] = valid.reshape(-1)
    return masks


def _fold_bn(w, bn, eps=1e-5):
    """Fold inference-mode BatchNorm into a (no-bias) conv weight + add-bias."""
    scale = bn["gamma"] / jnp.sqrt(bn["var"] + eps)
    bias = bn["beta"] - bn["mean"] * scale
    return w * scale.reshape((-1,) + (1,) * (w.ndim - 1)), bias


# ----------------------------------------------------------------------------
# Wrappers
# ----------------------------------------------------------------------------

def feature_standin(params, x, mask):
    """Encoder/Decoder stand-in: concat(x, mask) -> /2 avg pool -> 1x1 conv(->64)
    -> ReLU -> 1x1 conv(64->64) -> ReLU, channel-first, one Pallas kernel."""
    n, c, H, W = x.shape
    h, w = H // 2, W // 2
    hw = h * w
    tile = min(_round_up(hw, 128), 2048)     # lane tile, multiple of 128
    hw_p = _round_up(hw, tile)

    y = jnp.concatenate([x, mask], axis=1)                         # [N, C+1, H, W]
    y = y.reshape(n, c + 1, h, 2, w, 2).mean(axis=(3, 5))          # [N, C+1, h, w]
    y = y.reshape(n, c + 1, hw)
    if hw_p != hw:
        y = jnp.pad(y, ((0, 0), (0, 0), (0, hw_p - hw)))

    cin = c + 1
    feats = pl.pallas_call(
        _feat_kernel,
        out_shape=jax.ShapeDtypeStruct((n, 64, hw_p), jnp.bfloat16),
        grid=(n, hw_p // tile),
        in_specs=[
            pl.BlockSpec((1, cin, tile), lambda i, s: (i, 0, s)),
            pl.BlockSpec((64, cin), lambda i, s: (0, 0)),
            pl.BlockSpec((64, 64), lambda i, s: (0, 0)),
        ],
        out_specs=pl.BlockSpec((1, 64, tile), lambda i, s: (i, 0, s)),
        compiler_params=pltpu.CompilerParams(
            dimension_semantics=("parallel", "parallel")),
    )(y, params["enc_w"].astype(jnp.bfloat16), params["dec_w"].astype(jnp.bfloat16))
    return feats, (h, w, hw_p)


def refine_head(params, feats, h, w, hw_p):
    """self.refine applied to the decoder output; returns [N, 3, h, w] f32."""
    n = feats.shape[0]
    hw = h * w
    w0f, b0 = _fold_bn(params["r0_w"], params["bn0"])              # [32,64], [32]
    wkf, b1 = _fold_bn(params["r1_w"], params["bn1"])              # [32,3,3], [32]
    w2f, b2 = _fold_bn(params["r2_w"], params["bn2"])              # [3,32],  [3]
    # DW taps as [9, 32, 1] so wk[k] broadcasts per-channel over [32, hw_p].
    wk = jnp.transpose(wkf.reshape(32, 9), (1, 0)).reshape(9, 32, 1)
    dwm = jnp.asarray(_dw_masks(h, w, hw_p))                       # [9, 1, hw_p]

    kernel = functools.partial(_refine_kernel, w=w)
    img = pl.pallas_call(
        kernel,
        out_shape=jax.ShapeDtypeStruct((n, 3, hw_p), jnp.float32),
        grid=(n,),
        in_specs=[
            pl.BlockSpec((1, 64, hw_p), lambda i: (i, 0, 0)),
            pl.BlockSpec((32, 64), lambda i: (0, 0)),
            pl.BlockSpec((32, 1), lambda i: (0, 0)),
            pl.BlockSpec((9, 32, 1), lambda i: (0, 0, 0)),
            pl.BlockSpec((32, 1), lambda i: (0, 0)),
            pl.BlockSpec((3, 32), lambda i: (0, 0)),
            pl.BlockSpec((3, 1), lambda i: (0, 0)),
            pl.BlockSpec((9, 1, hw_p), lambda i: (0, 0, 0)),
        ],
        out_specs=pl.BlockSpec((1, 3, hw_p), lambda i: (i, 0, 0)),
        compiler_params=pltpu.CompilerParams(
            dimension_semantics=("parallel",)),
    )(feats, w0f.astype(jnp.bfloat16), b0.reshape(32, 1),
      wk, b1.reshape(32, 1),
      w2f.astype(jnp.bfloat16), b2.reshape(3, 1), dwm)
    # drop the lane padding; the reshape to [N,3,h,w] is metadata-only.
    return img[:, :, :hw].reshape(n, 3, h, w)


def resize_add(img, x):
    """F.interpolate(img, size=x.shape[2:], bilinear, align_corners=True) + x."""
    n, _, H, W = x.shape
    _, _, h, w = img.shape
    ry = jnp.asarray(_interp_matrix(H, h))                         # [H, h]
    cxt = jnp.asarray(_interp_matrix(W, w).T)                      # [w, W]
    return pl.pallas_call(
        _resize_add_kernel,
        out_shape=jax.ShapeDtypeStruct((n, 3, H, W), jnp.float32),
        grid=(n,),
        in_specs=[
            pl.BlockSpec((1, 3, h, w), lambda i: (i, 0, 0, 0)),
            pl.BlockSpec((H, h), lambda i: (0, 0)),
            pl.BlockSpec((w, W), lambda i: (0, 0)),
            pl.BlockSpec((1, 3, H, W), lambda i: (i, 0, 0, 0)),
        ],
        out_specs=pl.BlockSpec((1, 3, H, W), lambda i: (i, 0, 0, 0)),
        compiler_params=pltpu.CompilerParams(
            dimension_semantics=("parallel",)),
    )(img, ry, cxt, x)


# ----------------------------------------------------------------------------
# Parameters (deterministic synthetic init; BN = gamma 1 / beta 0 / stats 0,1)
# ----------------------------------------------------------------------------

def init_params(key, input_nc=3, init_gain=0.02):
    ks = jax.random.split(key, 5)
    p = {}
    # stand-in encoder: concat(x, mask) -> 1x1 conv (input_nc+1 -> 64)
    p["enc_w"] = init_gain * jax.random.normal(ks[0], (64, input_nc + 1), jnp.float32)
    # stand-in decoder: 1x1 conv 64 -> 64
    p["dec_w"] = init_gain * jax.random.normal(ks[1], (64, 64), jnp.float32)
    # refine head (exact shapes from the module)
    p["r0_w"] = init_gain * jax.random.normal(ks[2], (32, 64), jnp.float32)    # Conv2d(64,32,1)
    p["r1_w"] = init_gain * jax.random.normal(ks[3], (32, 3, 3), jnp.float32)  # Conv2d(32,32,3,groups=32)
    p["r2_w"] = init_gain * jax.random.normal(ks[4], (3, 32), jnp.float32)     # Conv2d(32,3,1)
    for name, c in (("bn0", 32), ("bn1", 32), ("bn2", 3)):
        p[name] = dict(gamma=jnp.ones((c,), jnp.float32),
                       beta=jnp.zeros((c,), jnp.float32),
                       mean=jnp.zeros((c,), jnp.float32),
                       var=jnp.ones((c,), jnp.float32))
    return p


# ----------------------------------------------------------------------------
# Model forward
# ----------------------------------------------------------------------------

def my_model_forward(params, x, mask):
    # TODO(synk): Encoder/Decoder class bodies are not in the provided source;
    # they are replaced by a deterministic fused 1x1-conv stand-in producing a
    # 64-channel feature map at half resolution.
    feats, (h, w, hw_p) = feature_standin(params, x, mask)     # [N, 64, hw_p] bf16
    img = refine_head(params, feats, h, w, hw_p)               # [N, 3, h, w] f32 (exact)
    return resize_add(img, x)                                  # [N, 3, H, W] f32 (exact)


# ----------------------------------------------------------------------------
# main
# ----------------------------------------------------------------------------

if __name__ == "__main__":
    key = jax.random.PRNGKey(0)
    k_x, k_m, k_p = jax.random.split(key, 3)

    N, C, H, W = 2, 3, 16, 16
    x = jax.random.normal(k_x, (N, C, H, W), jnp.float32)
    mask = (jax.random.uniform(k_m, (N, 1, H, W)) > 0.5).astype(jnp.float32)

    params = init_params(k_p, input_nc=C)

    fwd = jax.jit(my_model_forward)
    out = jax.block_until_ready(fwd(params, x, mask))
    assert out.shape == (N, C, H, W), out.shape
    assert out.dtype == jnp.float32
    print("KERNEL_OK")
</pallas_src>

<mosaic_0001>
module attributes {stable_mosaic.version = 11 : i64} {
  func.func @_feat_kernel(%arg0: i32, %arg1: i32, %arg2: memref<1x4x128xf32, #tpu.memory_space<vmem>>, %arg3: memref<64x4xbf16, #tpu.memory_space<vmem>>, %arg4: memref<64x64xbf16, #tpu.memory_space<vmem>>, %arg5: memref<1x64x128xbf16, #tpu.memory_space<vmem>>) attributes {dimension_semantics = [#tpu.dimension_semantics<parallel>, #tpu.dimension_semantics<parallel>], iteration_bounds = array<i64: 2, 1>, scalar_prefetch = 0 : i64, scratch_operands = 0 : i64, tpu.core_type = #tpu.core_type<tc>, window_params = [{transform_indices = @transform_0, window_bounds = array<i64: 1, 4, 128>}, {pipeline_mode = #tpu.pipeline_mode<synchronous>, transform_indices = @transform_1, window_bounds = array<i64: 64, 4>}, {pipeline_mode = #tpu.pipeline_mode<synchronous>, transform_indices = @transform_2, window_bounds = array<i64: 64, 64>}, {transform_indices = @transform_3, window_bounds = array<i64: 1, 64, 128>}]} {
    %c0 = arith.constant 0 : index
    %c0_0 = arith.constant 0 : index
    %c0_1 = arith.constant 0 : index
    %0 = vector.load %arg2[%c0, %c0_0, %c0_1] : memref<1x4x128xf32, #tpu.memory_space<vmem>>, vector<1x4x128xf32>
    %1 = vector.shape_cast %0 : vector<1x4x128xf32> to vector<4x128xf32>
    %2 = arith.truncf %1 : vector<4x128xf32> to vector<4x128xbf16>
    %c0_2 = arith.constant 0 : index
    %c0_3 = arith.constant 0 : index
    %3 = vector.load %arg3[%c0_2, %c0_3] : memref<64x4xbf16, #tpu.memory_space<vmem>>, vector<64x4xbf16>
    %cst = arith.constant dense<0.000000e+00> : vector<64x128xf32>
    %4 = tpu.matmul %3, %2, %cst {dimension_numbers = #tpu.dot_dimension_numbers<[1], [0], [0], [1], [0, 0, 1, 1], [], []>} : vector<64x4xbf16>, vector<4x128xbf16>, vector<64x128xf32> -> vector<64x128xf32>
    %cst_4 = arith.constant 0.000000e+00 : f32
    %5 = vector.broadcast %cst_4 : f32 to vector<64x128xf32>
    %6 = arith.maximumf %4, %5 : vector<64x128xf32>
    %7 = arith.truncf %6 : vector<64x128xf32> to vector<64x128xbf16>
    %c0_5 = arith.constant 0 : index
    %c0_6 = arith.constant 0 : index
    %8 = vector.load %arg4[%c0_5, %c0_6] : memref<64x64xbf16, #tpu.memory_space<vmem>>, vector<64x64xbf16>
    %cst_7 = arith.constant dense<0.000000e+00> : vector<64x128xf32>
    %9 = tpu.matmul %8, %7, %cst_7 {dimension_numbers = #tpu.dot_dimension_numbers<[1], [0], [0], [1], [0, 0, 1, 1], [], []>} : vector<64x64xbf16>, vector<64x128xbf16>, vector<64x128xf32> -> vector<64x128xf32>
    %cst_8 = arith.constant 0.000000e+00 : f32
    %10 = vector.broadcast %cst_8 : f32 to vector<64x128xf32>
    %11 = arith.maximumf %9, %10 : vector<64x128xf32>
    %12 = arith.truncf %11 : vector<64x128xf32> to vector<64x128xbf16>
    %c0_9 = arith.constant 0 : index
    %c0_10 = arith.constant 0 : index
    %c0_11 = arith.constant 0 : index
    %13 = vector.load %arg5[%c0_9, %c0_10, %c0_11] : memref<1x64x128xbf16, #tpu.memory_space<vmem>>, vector<1x64x128xbf16>
    %14 = vector.shape_cast %13 : vector<1x64x128xbf16> to vector<64x128xbf16>
    %15 = vector.shape_cast %12 : vector<64x128xbf16> to vector<1x64x128xbf16>
    tpu.vector_store %arg5[%c0_9, %c0_10, %c0_11], %15 {strides = array<i32>} : memref<1x64x128xbf16, #tpu.memory_space<vmem>>, vector<1x64x128xbf16>,
    return
  }
  func.func @transform_0(%arg0: i32, %arg1: i32) -> (i32, i32, i32) {
    %c0_i32 = arith.constant 0 : i32
    %c0_i32_0 = arith.constant 0 : i32
    return %arg0, %c0_i32, %arg1 : i32, i32, i32
  }
  func.func @transform_1(%arg0: i32, %arg1: i32) -> (i32, i32) {
    %c0_i32 = arith.constant 0 : i32
    %c0_i32_0 = arith.constant 0 : i32
    %c0_i32_1 = arith.constant 0 : i32
    return %c0_i32, %c0_i32_0 : i32, i32
  }
  func.func @transform_2(%arg0: i32, %arg1: i32) -> (i32, i32) {
    %c0_i32 = arith.constant 0 : i32
    %c0_i32_0 = arith.constant 0 : i32
    %c0_i32_1 = arith.constant 0 : i32
    return %c0_i32, %c0_i32_0 : i32, i32
  }
  func.func @transform_3(%arg0: i32, %arg1: i32) -> (i32, i32, i32) {
    %c0_i32 = arith.constant 0 : i32
    %c0_i32_0 = arith.constant 0 : i32
    return %arg0, %c0_i32, %arg1 : i32, i32, i32
  }
}

module attributes {stable_mosaic.version = 11 : i64} {
  func.func @_refine_kernel(%arg0: i32, %arg1: memref<1x64x128xbf16, #tpu.memory_space<vmem>>, %arg2: memref<32x64xbf16, #tpu.memory_space<vmem>>, %arg3: memref<32x1xf32, #tpu.memory_space<vmem>>, %arg4: memref<9x32x1xf32, #tpu.memory_space<vmem>>, %arg5: memref<32x1xf32, #tpu.memory_space<vmem>>, %arg6: memref<3x32xbf16, #tpu.memory_space<vmem>>, %arg7: memref<3x1xf32, #tpu.memory_space<vmem>>, %arg8: memref<9x1x128xf32, #tpu.memory_space<vmem>>, %arg9: memref<1x3x128xf32, #tpu.memory_space<vmem>>) attributes {dimension_semantics = [#tpu.dimension_semantics<parallel>], iteration_bounds = array<i64: 2>, scalar_prefetch = 0 : i64, scratch_operands = 0 : i64, tpu.core_type = #tpu.core_type<tc>, window_params = [{transform_indices = @transform_0, window_bounds = array<i64: 1, 64, 128>}, {pipeline_mode = #tpu.pipeline_mode<synchronous>, transform_indices = @transform_1, window_bounds = array<i64: 32, 64>}, {pipeline_mode = #tpu.pipeline_mode<synchronous>, transform_indices = @transform_2, window_bounds = array<i64: 32, 1>}, {pipeline_mode = #tpu.pipeline_mode<synchronous>, transform_indices = @transform_3, window_bounds = array<i64: 9, 32, 1>}, {pipeline_mode = #tpu.pipeline_mode<synchronous>, transform_indices = @transform_4, window_bounds = array<i64: 32, 1>}, {pipeline_mode = #tpu.pipeline_mode<synchronous>, transform_indices = @transform_5, window_bounds = array<i64: 3, 32>}, {pipeline_mode = #tpu.pipeline_mode<synchronous>, transform_indices = @transform_6, window_bounds = array<i64: 3, 1>}, {pipeline_mode = #tpu.pipeline_mode<synchronous>, transform_indices = @transform_7, window_bounds = array<i64: 9, 1, 128>}, {transform_indices = @transform_8, window_bounds = array<i64: 1, 3, 128>}]} {
    %c0 = arith.constant 0 : index
    %c0_0 = arith.constant 0 : index
    %c0_1 = arith.constant 0 : index
    %0 = vector.load %arg1[%c0, %c0_0, %c0_1] : memref<1x64x128xbf16, #tpu.memory_space<vmem>>, vector<1x64x128xbf16>
    %1 = vector.shape_cast %0 : vector<1x64x128xbf16> to vector<64x128xbf16>
    %c0_2 = arith.constant 0 : index
    %c0_3 = arith.constant 0 : index
    %2 = vector.load %arg2[%c0_2, %c0_3] : memref<32x64xbf16, #tpu.memory_space<vmem>>, vector<32x64xbf16>
    %cst = arith.constant dense<0.000000e+00> : vector<32x128xf32>
    %3 = tpu.matmul %2, %1, %cst {dimension_numbers = #tpu.dot_dimension_numbers<[1], [0], [0], [1], [0, 0, 1, 1], [], []>} : vector<32x64xbf16>, vector<64x128xbf16>, vector<32x128xf32> -> vector<32x128xf32>
    %c0_4 = arith.constant 0 : index
    %c0_5 = arith.constant 0 : index
    %4 = vector.load %arg3[%c0_4, %c0_5] : memref<32x1xf32, #tpu.memory_space<vmem>>, vector<32x1xf32>
    %5 = vector.broadcast %4 : vector<32x1xf32> to vector<32x128xf32>
    %6 = arith.addf %3, %5 : vector<32x128xf32>
    %cst_6 = arith.constant 0.000000e+00 : f32
    %7 = vector.broadcast %cst_6 : f32 to vector<32x128xf32>
    %8 = arith.maximumf %6, %7 : vector<32x128xf32>
    %cst_7 = arith.constant 0.000000e+00 : f32
    %9 = vector.broadcast %cst_7 : f32 to vector<32x128xf32>
    %c9_i32 = arith.constant 9 : i32
    %10 = tpu.dynamic_rotate %8 by %c9_i32 dim 1 : vector<32x128xf32>, i32 -> vector<32x128xf32>
    %c0_8 = arith.constant 0 : index
    %c0_9 = arith.constant 0 : index
    %c0_10 = arith.constant 0 : index
    %11 = vector.load %arg8[%c0_8, %c0_9, %c0_10] : memref<9x1x128xf32, #tpu.memory_space<vmem>>, vector<1x1x128xf32>
    %12 = vector.shape_cast %11 : vector<1x1x128xf32> to vector<1x128xf32>
    %13 = vector.broadcast %12 : vector<1x128xf32> to vector<32x128xf32>
    %14 = arith.mulf %10, %13 : vector<32x128xf32>
    %c0_11 = arith.constant 0 : index
    %c0_12 = arith.constant 0 : index
    %c0_13 = arith.constant 0 : index
    %15 = vector.load %arg4[%c0_11, %c0_12, %c0_13] : memref<9x32x1xf32, #tpu.memory_space<vmem>>, vector<1x32x1xf32>
    %16 = vector.shape_cast %15 : vector<1x32x1xf32> to vector<32x1xf32>
    %17 = vector.broadcast %16 : vector<32x1xf32> to vector<32x128xf32>
    %18 = arith.mulf %14, %17 : vector<32x128xf32>
    %19 = arith.addf %9, %18 : vector<32x128xf32>
    %c8_i32 = arith.constant 8 : i32
    %20 = tpu.dynamic_rotate %8 by %c8_i32 dim 1 : vector<32x128xf32>, i32 -> vector<32x128xf32>
    %c1 = arith.constant 1 : index
    %c0_14 = arith.constant 0 : index
    %c0_15 = arith.constant 0 : index
    %21 = vector.load %arg8[%c1, %c0_14, %c0_15] : memref<9x1x128xf32, #tpu.memory_space<vmem>>, vector<1x1x128xf32>
    %22 = vector.shape_cast %21 : vector<1x1x128xf32> to vector<1x128xf32>
    %23 = vector.broadcast %22 : vector<1x128xf32> to vector<32x128xf32>
    %24 = arith.mulf %20, %23 : vector<32x128xf32>
    %c1_16 = arith.constant 1 : index
    %c0_17 = arith.constant 0 : index
    %c0_18 = arith.constant 0 : index
    %25 = vector.load %arg4[%c1_16, %c0_17, %c0_18] : memref<9x32x1xf32, #tpu.memory_space<vmem>>, vector<1x32x1xf32>
    %26 = vector.shape_cast %25 : vector<1x32x1xf32> to vector<32x1xf32>
    %27 = vector.broadcast %26 : vector<32x1xf32> to vector<32x128xf32>
    %28 = arith.mulf %24, %27 : vector<32x128xf32>
    %29 = arith.addf %19, %28 : vector<32x128xf32>
    %c7_i32 = arith.constant 7 : i32
    %30 = tpu.dynamic_rotate %8 by %c7_i32 dim 1 : vector<32x128xf32>, i32 -> vector<32x128xf32>
    %c2 = arith.constant 2 : index
    %c0_19 = arith.constant 0 : index
    %c0_20 = arith.constant 0 : index
    %31 = vector.load %arg8[%c2, %c0_19, %c0_20] : memref<9x1x128xf32, #tpu.memory_space<vmem>>, vector<1x1x128xf32>
    %32 = vector.shape_cast %31 : vector<1x1x128xf32> to vector<1x128xf32>
    %33 = vector.broadcast %32 : vector<1x128xf32> to vector<32x128xf32>
    %34 = arith.mulf %30, %33 : vector<32x128xf32>
    %c2_21 = arith.constant 2 : index
    %c0_22 = arith.constant 0 : index
    %c0_23 = arith.constant 0 : index
    %35 = vector.load %arg4[%c2_21, %c0_22, %c0_23] : memref<9x32x1xf32, #tpu.memory_space<vmem>>, vector<1x32x1xf32>
    %36 = vector.shape_cast %35 : vector<1x32x1xf32> to vector<32x1xf32>
    %37 = vector.broadcast %36 : vector<32x1xf32> to vector<32x128xf32>
    %38 = arith.mulf %34, %37 : vector<32x128xf32>
    %39 = arith.addf %29, %38 : vector<32x128xf32>
    %c1_i32 = arith.constant 1 : i32
    %40 = tpu.dynamic_rotate %8 by %c1_i32 dim 1 : vector<32x128xf32>, i32 -> vector<32x128xf32>
    %c3 = arith.constant 3 : index
    %c0_24 = arith.constant 0 : index
    %c0_25 = arith.constant 0 : index
    %41 = vector.load %arg8[%c3, %c0_24, %c0_25] : memref<9x1x128xf32, #tpu.memory_space<vmem>>, vector<1x1x128xf32>
    %42 = vector.shape_cast %41 : vector<1x1x128xf32> to vector<1x128xf32>
    %43 = vector.broadcast %42 : vector<1x128xf32> to vector<32x128xf32>
    %44 = arith.mulf %40, %43 : vector<32x128xf32>
    %c3_26 = arith.constant 3 : index
    %c0_27 = arith.constant 0 : index
    %c0_28 = arith.constant 0 : index
    %45 = vector.load %arg4[%c3_26, %c0_27, %c0_28] : memref<9x32x1xf32, #tpu.memory_space<vmem>>, vector<1x32x1xf32>
    %46 = vector.shape_cast %45 : vector<1x32x1xf32> to vector<32x1xf32>
    %47 = vector.broadcast %46 : vector<32x1xf32> to vector<32x128xf32>
    %48 = arith.mulf %44, %47 : vector<32x128xf32>
    %49 = arith.addf %39, %48 : vector<32x128xf32>
    %c4 = arith.constant 4 : index
    %c0_29 = arith.constant 0 : index
    %c0_30 = arith.constant 0 : index
    %50 = vector.load %arg8[%c4, %c0_29, %c0_30] : memref<9x1x128xf32, #tpu.memory_space<vmem>>, vector<1x1x128xf32>
    %51 = vector.shape_cast %50 : vector<1x1x128xf32> to vector<1x128xf32>
    %52 = vector.broadcast %51 : vector<1x128xf32> to vector<32x128xf32>
    %53 = arith.mulf %8, %52 : vector<32x128xf32>
    %c4_31 = arith.constant 4 : index
    %c0_32 = arith.constant 0 : index
    %c0_33 = arith.constant 0 : index
    %54 = vector.load %arg4[%c4_31, %c0_32, %c0_33] : memref<9x32x1xf32, #tpu.memory_space<vmem>>, vector<1x32x1xf32>
    %55 = vector.shape_cast %54 : vector<1x32x1xf32> to vector<32x1xf32>
    %56 = vector.broadcast %55 : vector<32x1xf32> to vector<32x128xf32>
    %57 = arith.mulf %53, %56 : vector<32x128xf32>
    %58 = arith.addf %49, %57 : vector<32x128xf32>
    %c127_i32 = arith.constant 127 : i32
    %59 = tpu.dynamic_rotate %8 by %c127_i32 dim 1 : vector<32x128xf32>, i32 -> vector<32x128xf32>
    %c5 = arith.constant 5 : index
    %c0_34 = arith.constant 0 : index
    %c0_35 = arith.constant 0 : index
    %60 = vector.load %arg8[%c5, %c0_34, %c0_35] : memref<9x1x128xf32, #tpu.memory_space<vmem>>, vector<1x1x128xf32>
    %61 = vector.shape_cast %60 : vector<1x1x128xf32> to vector<1x128xf32>
    %62 = vector.broadcast %61 : vector<1x128xf32> to vector<32x128xf32>
    %63 = arith.mulf %59, %62 : vector<32x128xf32>
    %c5_36 = arith.constant 5 : index
    %c0_37 = arith.constant 0 : index
    %c0_38 = arith.constant 0 : index
    %64 = vector.load %arg4[%c5_36, %c0_37, %c0_38] : memref<9x32x1xf32, #tpu.memory_space<vmem>>, vector<1x32x1xf32>
    %65 = vector.shape_cast %64 : vector<1x32x1xf32> to vector<32x1xf32>
    %66 = vector.broadcast %65 : vector<32x1xf32> to vector<32x128xf32>
    %67 = arith.mulf %63, %66 : vector<32x128xf32>
    %68 = arith.addf %58, %67 : vector<32x128xf32>
    %c121_i32 = arith.constant 121 : i32
    %69 = tpu.dynamic_rotate %8 by %c121_i32 dim 1 : vector<32x128xf32>, i32 -> vector<32x128xf32>
    %c6 = arith.constant 6 : index
    %c0_39 = arith.constant 0 : index
    %c0_40 = arith.constant 0 : index
    %70 = vector.load %arg8[%c6, %c0_39, %c0_40] : memref<9x1x128xf32, #tpu.memory_space<vmem>>, vector<1x1x128xf32>
    %71 = vector.shape_cast %70 : vector<1x1x128xf32> to vector<1x128xf32>
    %72 = vector.broadcast %71 : vector<1x128xf32> to vector<32x128xf32>
    %73 = arith.mulf %69, %72 : vector<32x128xf32>
    %c6_41 = arith.constant 6 : index
    %c0_42 = arith.constant 0 : index
    %c0_43 = arith.constant 0 : index
    %74 = vector.load %arg4[%c6_41, %c0_42, %c0_43] : memref<9x32x1xf32, #tpu.memory_space<vmem>>, vector<1x32x1xf32>
    %75 = vector.shape_cast %74 : vector<1x32x1xf32> to vector<32x1xf32>
    %76 = vector.broadcast %75 : vector<32x1xf32> to vector<32x128xf32>
    %77 = arith.mulf %73, %76 : vector<32x128xf32>
    %78 = arith.addf %68, %77 : vector<32x128xf32>
    %c120_i32 = arith.constant 120 : i32
    %79 = tpu.dynamic_rotate %8 by %c120_i32 dim 1 : vector<32x128xf32>, i32 -> vector<32x128xf32>
    %c7 = arith.constant 7 : index
    %c0_44 = arith.constant 0 : index
    %c0_45 = arith.constant 0 : index
    %80 = vector.load %arg8[%c7, %c0_44, %c0_45] : memref<9x1x128xf32, #tpu.memory_space<vmem>>, vector<1x1x128xf32>
    %81 = vector.shape_cast %80 : vector<1x1x128xf32> to vector<1x128xf32>
    %82 = vector.broadcast %81 : vector<1x128xf32> to vector<32x128xf32>
    %83 = arith.mulf %79, %82 : vector<32x128xf32>
    %c7_46 = arith.constant 7 : index
    %c0_47 = arith.constant 0 : index
    %c0_48 = arith.constant 0 : index
    %84 = vector.load %arg4[%c7_46, %c0_47, %c0_48] : memref<9x32x1xf32, #tpu.memory_space<vmem>>, vector<1x32x1xf32>
    %85 = vector.shape_cast %84 : vector<1x32x1xf32> to vector<32x1xf32>
    %86 = vector.broadcast %85 : vector<32x1xf32> to vector<32x128xf32>
    %87 = arith.mulf %83, %86 : vector<32x128xf32>
    %88 = arith.addf %78, %87 : vector<32x128xf32>
    %c119_i32 = arith.constant 119 : i32
    %89 = tpu.dynamic_rotate %8 by %c119_i32 dim 1 : vector<32x128xf32>, i32 -> vector<32x128xf32>
    %c8 = arith.constant 8 : index
    %c0_49 = arith.constant 0 : index
    %c0_50 = arith.constant 0 : index
    %90 = vector.load %arg8[%c8, %c0_49, %c0_50] : memref<9x1x128xf32, #tpu.memory_space<vmem>>, vector<1x1x128xf32>
    %91 = vector.shape_cast %90 : vector<1x1x128xf32> to vector<1x128xf32>
    %92 = vector.broadcast %91 : vector<1x128xf32> to vector<32x128xf32>
    %93 = arith.mulf %89, %92 : vector<32x128xf32>
    %c8_51 = arith.constant 8 : index
    %c0_52 = arith.constant 0 : index
    %c0_53 = arith.constant 0 : index
    %94 = vector.load %arg4[%c8_51, %c0_52, %c0_53] : memref<9x32x1xf32, #tpu.memory_space<vmem>>, vector<1x32x1xf32>
    %95 = vector.shape_cast %94 : vector<1x32x1xf32> to vector<32x1xf32>
    %96 = vector.broadcast %95 : vector<32x1xf32> to vector<32x128xf32>
    %97 = arith.mulf %93, %96 : vector<32x128xf32>
    %98 = arith.addf %88, %97 : vector<32x128xf32>
    %c0_54 = arith.constant 0 : index
    %c0_55 = arith.constant 0 : index
    %99 = vector.load %arg5[%c0_54, %c0_55] : memref<32x1xf32, #tpu.memory_space<vmem>>, vector<32x1xf32>
    %100 = vector.broadcast %99 : vector<32x1xf32> to vector<32x128xf32>
    %101 = arith.addf %98, %100 : vector<32x128xf32>
    %cst_56 = arith.constant 0.000000e+00 : f32
    %102 = vector.broadcast %cst_56 : f32 to vector<32x128xf32>
    %103 = arith.maximumf %101, %102 : vector<32x128xf32>
    %c0_57 = arith.constant 0 : index
    %c0_58 = arith.constant 0 : index
    %104 = vector.load %arg6[%c0_57, %c0_58] : memref<3x32xbf16, #tpu.memory_space<vmem>>, vector<3x32xbf16>
    %105 = arith.truncf %103 : vector<32x128xf32> to vector<32x128xbf16>
    %cst_59 = arith.constant dense<0.000000e+00> : vector<3x128xf32>
    %106 = tpu.matmul %104, %105, %cst_59 {dimension_numbers = #tpu.dot_dimension_numbers<[1], [0], [0], [1], [0, 0, 1, 1], [], []>} : vector<3x32xbf16>, vector<32x128xbf16>, vector<3x128xf32> -> vector<3x128xf32>
    %c0_60 = arith.constant 0 : index
    %c0_61 = arith.constant 0 : index
    %107 = vector.load %arg7[%c0_60, %c0_61] : memref<3x1xf32, #tpu.memory_space<vmem>>, vector<3x1xf32>
    %108 = vector.broadcast %107 : vector<3x1xf32> to vector<3x128xf32>
    %109 = arith.addf %106, %108 : vector<3x128xf32>
    %c0_62 = arith.constant 0 : index
    %c0_63 = arith.constant 0 : index
    %c0_64 = arith.constant 0 : index
    %110 = vector.load %arg9[%c0_62, %c0_63, %c0_64] : memref<1x3x128xf32, #tpu.memory_space<vmem>>, vector<1x3x128xf32>
    %111 = vector.shape_cast %110 : vector<1x3x128xf32> to vector<3x128xf32>
    %112 = vector.shape_cast %109 : vector<3x128xf32> to vector<1x3x128xf32>
    tpu.vector_store %arg9[%c0_62, %c0_63, %c0_64], %112 {strides = array<i32>} : memref<1x3x128xf32, #tpu.memory_space<vmem>>, vector<1x3x128xf32>,
    return
  }
  func.func @transform_0(%arg0: i32) -> (i32, i32, i32) {
    %c0_i32 = arith.constant 0 : i32
    %c0_i32_0 = arith.constant 0 : i32
    %c0_i32_1 = arith.constant 0 : i32
    return %arg0, %c0_i32, %c0_i32_0 : i32, i32, i32
  }
  func.func @transform_1(%arg0: i32) -> (i32, i32) {
    %c0_i32 = arith.constant 0 : i32
    %c0_i32_0 = arith.constant 0 : i32
    %c0_i32_1 = arith.constant 0 : i32
    return %c0_i32, %c0_i32_0 : i32, i32
  }
  func.func @transform_2(%arg0: i32) -> (i32, i32) {
    %c0_i32 = arith.constant 0 : i32
    %c0_i32_0 = arith.constant 0 : i32
    %c0_i32_1 = arith.constant 0 : i32
    return %c0_i32, %c0_i32_0 : i32, i32
  }
  func.func @transform_3(%arg0: i32) -> (i32, i32, i32) {
    %c0_i32 = arith.constant 0 : i32
    %c0_i32_0 = arith.constant 0 : i32
    %c0_i32_1 = arith.constant 0 : i32
    %c0_i32_2 = arith.constant 0 : i32
    return %c0_i32, %c0_i32_0, %c0_i32_1 : i32, i32, i32
  }
  func.func @transform_4(%arg0: i32) -> (i32, i32) {
    %c0_i32 = arith.constant 0 : i32
    %c0_i32_0 = arith.constant 0 : i32
    %c0_i32_1 = arith.constant 0 : i32
    return %c0_i32, %c0_i32_0 : i32, i32
  }
  func.func @transform_5(%arg0: i32) -> (i32, i32) {
    %c0_i32 = arith.constant 0 : i32
    %c0_i32_0 = arith.constant 0 : i32
    %c0_i32_1 = arith.constant 0 : i32
    return %c0_i32, %c0_i32_0 : i32, i32
  }
  func.func @transform_6(%arg0: i32) -> (i32, i32) {
    %c0_i32 = arith.constant 0 : i32
    %c0_i32_0 = arith.constant 0 : i32
    %c0_i32_1 = arith.constant 0 : i32
    return %c0_i32, %c0_i32_0 : i32, i32
  }
  func.func @transform_7(%arg0: i32) -> (i32, i32, i32) {
    %c0_i32 = arith.constant 0 : i32
    %c0_i32_0 = arith.constant 0 : i32
    %c0_i32_1 = arith.constant 0 : i32
    %c0_i32_2 = arith.constant 0 : i32
    return %c0_i32, %c0_i32_0, %c0_i32_1 : i32, i32, i32
  }
  func.func @transform_8(%arg0: i32) -> (i32, i32, i32) {
    %c0_i32 = arith.constant 0 : i32
    %c0_i32_0 = arith.constant 0 : i32
    %c0_i32_1 = arith.constant 0 : i32
    return %arg0, %c0_i32, %c0_i32_0 : i32, i32, i32
  }
}

module attributes {stable_mosaic.version = 11 : i64} {
  func.func @_resize_add_kernel(%arg0: i32, %arg1: memref<1x3x8x8xf32, #tpu.memory_space<vmem>>, %arg2: memref<16x8xf32, #tpu.memory_space<vmem>>, %arg3: memref<8x16xf32, #tpu.memory_space<vmem>>, %arg4: memref<1x3x16x16xf32, #tpu.memory_space<vmem>>, %arg5: memref<1x3x16x16xf32, #tpu.memory_space<vmem>>) attributes {dimension_semantics = [#tpu.dimension_semantics<parallel>], iteration_bounds = array<i64: 2>, scalar_prefetch = 0 : i64, scratch_operands = 0 : i64, tpu.core_type = #tpu.core_type<tc>, window_params = [{transform_indices = @transform_0, window_bounds = array<i64: 1, 3, 8, 8>}, {pipeline_mode = #tpu.pipeline_mode<synchronous>, transform_indices = @transform_1, window_bounds = array<i64: 16, 8>}, {pipeline_mode = #tpu.pipeline_mode<synchronous>, transform_indices = @transform_2, window_bounds = array<i64: 8, 16>}, {transform_indices = @transform_3, window_bounds = array<i64: 1, 3, 16, 16>}, {transform_indices = @transform_4, window_bounds = array<i64: 1, 3, 16, 16>}]} {
    %c0 = arith.constant 0 : index
    %c0_0 = arith.constant 0 : index
    %c0_1 = arith.constant 0 : index
    %c0_2 = arith.constant 0 : index
    %0 = vector.load %arg1[%c0, %c0_0, %c0_1, %c0_2] : memref<1x3x8x8xf32, #tpu.memory_space<vmem>>, vector<1x1x8x8xf32>
    %1 = vector.shape_cast %0 : vector<1x1x8x8xf32> to vector<8x8xf32>
    %c0_3 = arith.constant 0 : index
    %c0_4 = arith.constant 0 : index
    %2 = vector.load %arg3[%c0_3, %c0_4] : memref<8x16xf32, #tpu.memory_space<vmem>>, vector<8x16xf32>
    %cst = arith.constant dense<0.000000e+00> : vector<8x16xf32>
    %3 = tpu.matmul %1, %2, %cst {dimension_numbers = #tpu.dot_dimension_numbers<[1], [0], [0], [1], [0, 0, 1, 1], [], []>} : vector<8x8xf32>, vector<8x16xf32>, vector<8x16xf32> -> vector<8x16xf32>
    %c0_5 = arith.constant 0 : index
    %c0_6 = arith.constant 0 : index
    %4 = vector.load %arg2[%c0_5, %c0_6] : memref<16x8xf32, #tpu.memory_space<vmem>>, vector<16x8xf32>
    %cst_7 = arith.constant dense<0.000000e+00> : vector<16x16xf32>
    %5 = tpu.matmul %4, %3, %cst_7 {dimension_numbers = #tpu.dot_dimension_numbers<[1], [0], [0], [1], [0, 0, 1, 1], [], []>} : vector<16x8xf32>, vector<8x16xf32>, vector<16x16xf32> -> vector<16x16xf32>
    %c0_8 = arith.constant 0 : index
    %c0_9 = arith.constant 0 : index
    %c0_10 = arith.constant 0 : index
    %c0_11 = arith.constant 0 : index
    %6 = vector.load %arg4[%c0_8, %c0_9, %c0_10, %c0_11] : memref<1x3x16x16xf32, #tpu.memory_space<vmem>>, vector<1x1x16x16xf32>
    %7 = vector.shape_cast %6 : vector<1x1x16x16xf32> to vector<16x16xf32>
    %8 = arith.addf %5, %7 : vector<16x16xf32>
    %c0_12 = arith.constant 0 : index
    %c0_13 = arith.constant 0 : index
    %c0_14 = arith.constant 0 : index
    %c0_15 = arith.constant 0 : index
    %9 = vector.load %arg5[%c0_12, %c0_13, %c0_14, %c0_15] : memref<1x3x16x16xf32, #tpu.memory_space<vmem>>, vector<1x1x16x16xf32>
    %10 = vector.shape_cast %9 : vector<1x1x16x16xf32> to vector<16x16xf32>
    %11 = vector.shape_cast %8 : vector<16x16xf32> to vector<1x1x16x16xf32>
    tpu.vector_store %arg5[%c0_12, %c0_13, %c0_14, %c0_15], %11 {strides = array<i32>} : memref<1x3x16x16xf32, #tpu.memory_space<vmem>>, vector<1x1x16x16xf32>,
    %c0_16 = arith.constant 0 : index
    %c1 = arith.constant 1 : index
    %c0_17 = arith.constant 0 : index
    %c0_18 = arith.constant 0 : index
    %12 = vector.load %arg1[%c0_16, %c1, %c0_17, %c0_18] : memref<1x3x8x8xf32, #tpu.memory_space<vmem>>, vector<1x1x8x8xf32>
    %13 = vector.shape_cast %12 : vector<1x1x8x8xf32> to vector<8x8xf32>
    %c0_19 = arith.constant 0 : index
    %c0_20 = arith.constant 0 : index
    %14 = vector.load %arg3[%c0_19, %c0_20] : memref<8x16xf32, #tpu.memory_space<vmem>>, vector<8x16xf32>
    %cst_21 = arith.constant dense<0.000000e+00> : vector<8x16xf32>
    %15 = tpu.matmul %13, %14, %cst_21 {dimension_numbers = #tpu.dot_dimension_numbers<[1], [0], [0], [1], [0, 0, 1, 1], [], []>} : vector<8x8xf32>, vector<8x16xf32>, vector<8x16xf32> -> vector<8x16xf32>
    %c0_22 = arith.constant 0 : index
    %c0_23 = arith.constant 0 : index
    %16 = vector.load %arg2[%c0_22, %c0_23] : memref<16x8xf32, #tpu.memory_space<vmem>>, vector<16x8xf32>
    %cst_24 = arith.constant dense<0.000000e+00> : vector<16x16xf32>
    %17 = tpu.matmul %16, %15, %cst_24 {dimension_numbers = #tpu.dot_dimension_numbers<[1], [0], [0], [1], [0, 0, 1, 1], [], []>} : vector<16x8xf32>, vector<8x16xf32>, vector<16x16xf32> -> vector<16x16xf32>
    %c0_25 = arith.constant 0 : index
    %c1_26 = arith.constant 1 : index
    %c0_27 = arith.constant 0 : index
    %c0_28 = arith.constant 0 : index
    %18 = vector.load %arg4[%c0_25, %c1_26, %c0_27, %c0_28] : memref<1x3x16x16xf32, #tpu.memory_space<vmem>>, vector<1x1x16x16xf32>
    %19 = vector.shape_cast %18 : vector<1x1x16x16xf32> to vector<16x16xf32>
    %20 = arith.addf %17, %19 : vector<16x16xf32>
    %c0_29 = arith.constant 0 : index
    %c1_30 = arith.constant 1 : index
    %c0_31 = arith.constant 0 : index
    %c0_32 = arith.constant 0 : index
    %21 = vector.load %arg5[%c0_29, %c1_30, %c0_31, %c0_32] : memref<1x3x16x16xf32, #tpu.memory_space<vmem>>, vector<1x1x16x16xf32>
    %22 = vector.shape_cast %21 : vector<1x1x16x16xf32> to vector<16x16xf32>
    %23 = vector.shape_cast %20 : vector<16x16xf32> to vector<1x1x16x16xf32>
    tpu.vector_store %arg5[%c0_29, %c1_30, %c0_31, %c0_32], %23 {strides = array<i32>} : memref<1x3x16x16xf32, #tpu.memory_space<vmem>>, vector<1x1x16x16xf32>,
    %c0_33 = arith.constant 0 : index
    %c2 = arith.constant 2 : index
    %c0_34 = arith.constant 0 : index
    %c0_35 = arith.constant 0 : index
    %24 = vector.load %arg1[%c0_33, %c2, %c0_34, %c0_35] : memref<1x3x8x8xf32, #tpu.memory_space<vmem>>, vector<1x1x8x8xf32>
    %25 = vector.shape_cast %24 : vector<1x1x8x8xf32> to vector<8x8xf32>
    %c0_36 = arith.constant 0 : index
    %c0_37 = arith.constant 0 : index
    %26 = vector.load %arg3[%c0_36, %c0_37] : memref<8x16xf32, #tpu.memory_space<vmem>>, vector<8x16xf32>
    %cst_38 = arith.constant dense<0.000000e+00> : vector<8x16xf32>
    %27 = tpu.matmul %25, %26, %cst_38 {dimension_numbers = #tpu.dot_dimension_numbers<[1], [0], [0], [1], [0, 0, 1, 1], [], []>} : vector<8x8xf32>, vector<8x16xf32>, vector<8x16xf32> -> vector<8x16xf32>
    %c0_39 = arith.constant 0 : index
    %c0_40 = arith.constant 0 : index
    %28 = vector.load %arg2[%c0_39, %c0_40] : memref<16x8xf32, #tpu.memory_space<vmem>>, vector<16x8xf32>
    %cst_41 = arith.constant dense<0.000000e+00> : vector<16x16xf32>
    %29 = tpu.matmul %28, %27, %cst_41 {dimension_numbers = #tpu.dot_dimension_numbers<[1], [0], [0], [1], [0, 0, 1, 1], [], []>} : vector<16x8xf32>, vector<8x16xf32>, vector<16x16xf32> -> vector<16x16xf32>
    %c0_42 = arith.constant 0 : index
    %c2_43 = arith.constant 2 : index
    %c0_44 = arith.constant 0 : index
    %c0_45 = arith.constant 0 : index
    %30 = vector.load %arg4[%c0_42, %c2_43, %c0_44, %c0_45] : memref<1x3x16x16xf32, #tpu.memory_space<vmem>>, vector<1x1x16x16xf32>
    %31 = vector.shape_cast %30 : vector<1x1x16x16xf32> to vector<16x16xf32>
    %32 = arith.addf %29, %31 : vector<16x16xf32>
    %c0_46 = arith.constant 0 : index
    %c2_47 = arith.constant 2 : index
    %c0_48 = arith.constant 0 : index
    %c0_49 = arith.constant 0 : index
    %33 = vector.load %arg5[%c0_46, %c2_47, %c0_48, %c0_49] : memref<1x3x16x16xf32, #tpu.memory_space<vmem>>, vector<1x1x16x16xf32>
    %34 = vector.shape_cast %33 : vector<1x1x16x16xf32> to vector<16x16xf32>
    %35 = vector.shape_cast %32 : vector<16x16xf32> to vector<1x1x16x16xf32>
    tpu.vector_store %arg5[%c0_46, %c2_47, %c0_48, %c0_49], %35 {strides = array<i32>} : memref<1x3x16x16xf32, #tpu.memory_space<vmem>>, vector<1x1x16x16xf32>,
    return
  }
  func.func @transform_0(%arg0: i32) -> (i32, i32, i32, i32) {
    %c0_i32 = arith.constant 0 : i32
    %c0_i32_0 = arith.constant 0 : i32
    %c0_i32_1 = arith.constant 0 : i32
    %c0_i32_2 = arith.constant 0 : i32
    return %arg0, %c0_i32, %c0_i32_0, %c0_i32_1 : i32, i32, i32, i32
  }
  func.func @transform_1(%arg0: i32) -> (i32, i32) {
    %c0_i32 = arith.constant 0 : i32
    %c0_i32_0 = arith.constant 0 : i32
    %c0_i32_1 = arith.constant 0 : i32
    return %c0_i32, %c0_i32_0 : i32, i32
  }
  func.func @transform_2(%arg0: i32) -> (i32, i32) {
    %c0_i32 = arith.constant 0 : i32
    %c0_i32_0 = arith.constant 0 : i32
    %c0_i32_1 = arith.constant 0 : i32
    return %c0_i32, %c0_i32_0 : i32, i32
  }
  func.func @transform_3(%arg0: i32) -> (i32, i32, i32, i32) {
    %c0_i32 = arith.constant 0 : i32
    %c0_i32_0 = arith.constant 0 : i32
    %c0_i32_1 = arith.constant 0 : i32
    %c0_i32_2 = arith.constant 0 : i32
    return %arg0, %c0_i32, %c0_i32_0, %c0_i32_1 : i32, i32, i32, i32
  }
  func.func @transform_4(%arg0: i32) -> (i32, i32, i32, i32) {
    %c0_i32 = arith.constant 0 : i32
    %c0_i32_0 = arith.constant 0 : i32
    %c0_i32_1 = arith.constant 0 : i32
    %c0_i32_2 = arith.constant 0 : i32
    return %arg0, %c0_i32, %c0_i32_0, %c0_i32_1 : i32, i32, i32, i32
  }
}

</mosaic_0001>

<llo_original>
// kernel: my_model_forward.3
$region0: #{my_model_forward.3}
  #allocation0 [shape = 'u32[]', space=smem, size = 0x4, offset = 0x4, fixed_abs, tag = 'smem constant byte address 0x4 - core index']
  #allocation1 [shape = 'u32[72,128]{1,0:T(1,128)}', space=vmem, size = 0x9000, scoped, tag = 'internal scratch']
  %s0 = inlined_call_operand.vmem [shape: f32[2,4,128], index: 0, kind: input, shape index: {}]
  %s1 = inlined_call_operand.vmem [shape: bf16[64,4], index: 1, kind: input, shape index: {}]
  %s2 = inlined_call_operand.vmem [shape: bf16[64,64], index: 2, kind: input, shape index: {}]
  %s3 = inlined_call_operand.vmem [shape: bf16[2,64,128], index: 3, kind: output, shape index: {}]
  %s4 = sld [smem:[#allocation0]]
  $region45: #{my_model_forward.3} parent=0
    _
  %s6 = ssub.s32 1, %s4
  %s7 = scalar_select 0, %s6, %s4
  loop: start=0, step=1, limit=4
  $region2: #{my_model_forward.3} parent=0 // loop_pre_header
    _
  $region3: #{my_model_forward.3} parent=0 // loop_header
    %s9 = sphi 0, %s13
    %p10 = scmp.ge.s32.totalorder %s9, 4
    %s16 = sphi 0, %s28
    %s17 = sphi 0, %s24
    %s18 = sphi 0, %s16
    %s19 = sphi 0, %s17
    %s20 = sphi 0, %s18
    %s21 = sphi 0, %s19
    %s33 = sphi 0, %s35
    %s36 = sphi 0, %s33
    %s37 = sphi 0, %s36
    %s53 = sphi 0, %s37
    %s57 = sphi 0, %s57
    %s59 = sphi 0, %s57
    %s60 = sphi 0, %s59
    %s74 = sphi 0, %s60
    %s78 = sphi 0, %s78
    %s80 = sphi 0, %s78
    %s81 = sphi 0, %s80
    %s95 = sphi 0, %s81
    %s103 = sphi 0, %s105
    %s106 = sphi 0, %s103
    %s107 = sphi 0, %s106
    %s123 = sphi 0, %s107
  $region4: #{my_model_forward.3} parent=0 // loop_header_branch
    %12 = sbr.rel (%p10) target = $region8
  $region5: #{my_model_forward.3} parent=0 // loop_body
    %s14 = ssub.s32 %s9, 1
    %s15 = ssub.s32 %s9, 2
    %s22 = sadd.s32 1, %s17
    %p23 = scmp.ge.s32.totalorder %s22, 1
    %s24 = scalar_select %p23, 0, %s22
    %s25 = sadd.s32 1, %s16
    %s26 = scalar_select %p23, %s25, %s16
    %p27 = scmp.ge.s32.totalorder %s26, 2
    %s28 = scalar_select %p27, 0, %s26
    %s29 = ssub.s32 %s16, %s28
    %s30 = ssub.s32 %s17, %s24
    %s31 = sor.u32 %s29, %s30
    %p32 = scmp.eq.s32.totalorder %s31, 0
    %s34 = sadd.s32 %s33, 1
    %s35 = scalar_select %p32, %s33, %s34
    %p38 = pneg %p32
    %p39 = scmp.eq.s32.totalorder %s9, 1
    %p40 = por %p38, %p39
    %p41 = scmp.ne.s32.totalorder %s33, %s36
    %p42 = scmp.eq.s32.totalorder %s9, 0
    %p43 = por %p41, %p42
    %p44 = scmp.ne.s32.totalorder %s33, %s36
    %p45 = scmp.eq.s32.totalorder %s14, 1
    %p46 = por %p44, %p45
    %p47 = scmp.ne.s32.totalorder %s36, %s37
    %p48 = scmp.eq.s32.totalorder %s14, 0
    %p49 = por %p47, %p48
    %p50 = scmp.ne.s32.totalorder %s36, %s37
    %p51 = scmp.eq.s32.totalorder %s15, 1
    %p52 = por %p50, %p51
    %p54 = scmp.ne.s32.totalorder %s37, %s53
    %p55 = scmp.eq.s32.totalorder %s15, 0
    %p56 = por %p54, %p55
    %s58 = sadd.s32 %s57, 1
    %p61 = scmp.eq.s32.totalorder %s9, 1
    %p62 = scmp.ne.s32.totalorder %s57, %s59
    %p63 = scmp.eq.s32.totalorder %s9, 0
    %p64 = por %p62, %p63
    %p65 = scmp.ne.s32.totalorder %s57, %s59
    %p66 = scmp.eq.s32.totalorder %s14, 1
    %p67 = por %p65, %p66
    %p68 = scmp.ne.s32.totalorder %s59, %s60
    %p69 = scmp.eq.s32.totalorder %s14, 0
    %p70 = por %p68, %p69
    %p71 = scmp.ne.s32.totalorder %s59, %s60
    %p72 = scmp.eq.s32.totalorder %s15, 1
    %p73 = por %p71, %p72
    %p75 = scmp.ne.s32.totalorder %s60, %s74
    %p76 = scmp.eq.s32.totalorder %s15, 0
    %p77 = por %p75, %p76
    %s79 = sadd.s32 %s78, 1
    %p82 = scmp.eq.s32.totalorder %s9, 1
    %p83 = scmp.ne.s32.totalorder %s78, %s80
    %p84 = scmp.eq.s32.totalorder %s9, 0
    %p85 = por %p83, %p84
    %p86 = scmp.ne.s32.totalorder %s78, %s80
    %p87 = scmp.eq.s32.totalorder %s14, 1
    %p88 = por %p86, %p87
    %p89 = scmp.ne.s32.totalorder %s80, %s81
    %p90 = scmp.eq.s32.totalorder %s14, 0
    %p91 = por %p89, %p90
    %p92 = scmp.ne.s32.totalorder %s80, %s81
    %p93 = scmp.eq.s32.totalorder %s15, 1
    %p94 = por %p92, %p93
    %p96 = scmp.ne.s32.totalorder %s81, %s95
    %p97 = scmp.eq.s32.totalorder %s15, 0
    %p98 = por %p96, %p97
    %s99 = ssub.s32 %s16, %s28
    %s100 = ssub.s32 %s17, %s24
    %s101 = sor.u32 %s99, %s100
    %p102 = scmp.eq.s32.totalorder %s101, 0
    %s104 = sadd.s32 %s103, 1
    %s105 = scalar_select %p102, %s103, %s104
    %p108 = pneg %p102
    %p109 = scmp.eq.s32.totalorder %s9, 1
    %p110 = por %p108, %p109
    %p111 = scmp.ne.s32.totalorder %s103, %s106
    %p112 = scmp.eq.s32.totalorder %s9, 0
    %p113 = por %p111, %p112
    %p114 = scmp.ne.s32.totalorder %s103, %s106
    %p115 = scmp.eq.s32.totalorder %s14, 1
    %p116 = por %p114, %p115
    %p117 = scmp.ne.s32.totalorder %s106, %s107
    %p118 = scmp.eq.s32.totalorder %s14, 0
    %p119 = por %p117, %p118
    %p120 = scmp.ne.s32.totalorder %s106, %s107
    %p121 = scmp.eq.s32.totalorder %s15, 1
    %p122 = por %p120, %p121
    %p124 = scmp.ne.s32.totalorder %s107, %s123
    %p125 = scmp.eq.s32.totalorder %s15, 0
    %p126 = por %p124, %p125
    %p127 = scmp.le.s32.totalorder 1, %s9
    %p128 = scmp.lt.s32.totalorder %s9, 3
    %p129 = pnand %p127, %p128
    %p130 = pneg %p129
    // Predicated region
    $region9: #{my_model_forward.3} parent=5 // pred_check
      _
    $region10: #{my_model_forward.3} parent=5 // pred_check_branch
      %132 = sbr.rel (%p129) target = $region12
    $region11: #{my_model_forward.3} parent=5 // pred_region
      %s133 = ssub.s32 %s9, 1
      // Predicated region
      $region13: #{my_model_forward.3} parent=11 // pred_check
        %p134 = pneg %p70
      $region14: #{my_model_forward.3} parent=11 // pred_check_branch
        %136 = sbr.rel (%p134) target = $region16
      $region15: #{my_model_forward.3} parent=11 // pred_region
        _
      $region16: #{my_model_forward.3} parent=11 // pred_fallthru
        _
      // Predicated region
      $region17: #{my_model_forward.3} parent=11 // pred_check
        %p137 = pneg %p91
      $region18: #{my_model_forward.3} parent=11 // pred_check_branch
        %139 = sbr.rel (%p137) target = $region20
      $region19: #{my_model_forward.3} parent=11 // pred_region
        _
      $region20: #{my_model_forward.3} parent=11 // pred_fallthru
        _
    $region12: #{my_model_forward.3} parent=5 // pred_fallthru
      _
    %p140 = scmp.lt.s32.totalorder %s9, 2
    // Predicated region
    $region21: #{my_model_forward.3} parent=5 // pred_check
      %p141 = pneg %p140
    $region22: #{my_model_forward.3} parent=5 // pred_check_branch
      %143 = sbr.rel (%p141) target = $region24
    $region23: #{my_model_forward.3} parent=5 // pred_region
      // Predicated region
      $region25: #{my_model_forward.3} parent=23 // pred_check
        %p144 = pneg %p43
      $region26: #{my_model_forward.3} parent=23 // pred_check_branch
        %146 = sbr.rel (%p144) target = $region28
      $region27: #{my_model_forward.3} parent=23 // pred_region
        %p147 = scmp.lt.s32.totalorder %s16, 1
        %s148 = scalar_select %p147, %s16, 1
        %p149 = scmp.lt.s32.totalorder %s17, 0
        %s150 = scalar_select %p149, %s17, 0
        %s151 = sadd.s32 %s150, %s148
        %s152 = smul.addr %s151, 4
        %s153 = scalar_lea.vmem %s0, %s152
      $region28: #{my_model_forward.3} parent=23 // pred_fallthru
        _
    $region24: #{my_model_forward.3} parent=5 // pred_fallthru
      _
    %p154 = scmp.le.s32.totalorder 1, %s9
    %p155 = scmp.lt.s32.totalorder %s9, 3
    %p156 = pnand %p154, %p155
    %p157 = pneg %p156
    // Predicated region
    $region29: #{my_model_forward.3} parent=5 // pred_check
      _
    $region30: #{my_model_forward.3} parent=5 // pred_check_branch
      %159 = sbr.rel (%p156) target = $region32
    $region31: #{my_model_forward.3} parent=5 // pred_region
      %s160 = ssub.s32 %s9, 1
      %p161 = scmp.lt.s32.totalorder %s18, 1
      %s162 = scalar_select %p161, %s18, 1
      %p163 = scmp.lt.s32.totalorder %s19, 0
      %s164 = scalar_select %p163, %s19, 0
      %s165 = sadd.s32 %s164, %s162
      %s166 = smul.addr %s165, 4
      %s167 = scalar_lea.vmem %s0, %s166
      %p168 = pneg %p49
      %p169 = pneg %p46
      %p170 = pneg %p70
      %p171 = pneg %p67
      %p172 = pneg %p91
      %p173 = pneg %p88
      %p174 = pneg %p119
      %p175 = pneg %p116
      %p176 = scmp.lt.s32.totalorder %s18, 1
      %s177 = scalar_select %p176, %s18, 1
      %p178 = scmp.lt.s32.totalorder %s19, 0
      %s179 = scalar_select %p178, %s19, 0
      %s180 = smul.addr %s177, 8
      %s181 = sadd.s32 %s179, %s180
      %s182 = smul.addr %s181, 4
      %s183 = scalar_lea.vmem %s3, %s182
      %p184 = scmp.lt.s32.totalorder %s18, 1
      %s185 = scalar_select %p184, %s18, 1
      %p186 = scmp.lt.s32.totalorder %s19, 0
      %s187 = scalar_select %p186, %s19, 0
      %s188 = sadd.s32 %s187, %s185
      %s189 = smul.addr %s188, 4
      %s190 = scalar_lea.vmem %s0, %s189
      %p191 = scmp.lt.s32.totalorder %s18, 1
      %s192 = scalar_select %p191, %s18, 1
      %p193 = scmp.lt.s32.totalorder %s19, 0
      %s194 = scalar_select %p193, %s19, 0
      %s195 = smul.addr %s192, 8
      %s196 = sadd.s32 %s194, %s195
      %s197 = smul.addr %s196, 4
      %s198 = scalar_lea.vmem %s3, %s197
      %v200 = vld [vmem:[%s190] sm:$0xf]
      %v201 = vpack.c.bf16 %v200, %v200
      %v202 = vld [vmem:[%s1] sm:$0xf]
      %v203 = vld [vmem:[%s1 + $0x4] sm:$0xf]
      %v204 = vld [vmem:[%s1 + $0x8] sm:$0xf]
      %v205 = vld [vmem:[%s1 + $0xc] sm:$0xf]
      %v206 = vld [vmem:[%s1 + $0x10] sm:$0xf]
      %v207 = vld [vmem:[%s1 + $0x14] sm:$0xf]
      %v208 = vld [vmem:[%s1 + $0x18] sm:$0xf]
      %v209 = vld [vmem:[%s1 + $0x1c] sm:$0xf]
      %v218 = vunpack.c.l.b16 %v202
      %v219 = vunpack.c.l.b16 %v203
      %v220 = vunpack.c.l.b16 %v204
      %v221 = vunpack.c.l.b16 %v205
      %v222 = vunpack.c.l.b16 %v206
      %v223 = vunpack.c.l.b16 %v207
      %v224 = vunpack.c.l.b16 %v208
      %v225 = vunpack.c.l.b16 %v209
      %v226 = vpack.c.b16 %v219, %v218
      %v227 = vpack.c.b16 %v221, %v220
      %v228 = vpack.c.b16 %v223, %v222
      %v229 = vpack.c.b16 %v225, %v224
      %vm230 = vcmask 31744
      %v232 = vsel %vm230, %v226, 0
      %v235 = vsel %vm230, %v227, 0
      %v238 = vsel %vm230, %v228, 0
      %v241 = vsel %vm230, %v229, 0
      %vm243 = vcmask 1041408
      %v245 = vsel %vm243, %v201, 0
      %247 = vmatpush.bf16.msra.mxu0 0
      %248 = vmatpush.bf16.msra.mxu0 0
      %249 = vmatpush.bf16.msra.mxu0 0
      %250 = vmatpush.bf16.msra.mxu0 0
      %251 = vmatpush.bf16.msra.mxu0 0
      %252 = vmatpush.bf16.msra.mxu0 0
      %253 = vmatpush.bf16.msra.mxu0 0
      %254 = vmatpush.bf16.msra.mxu0 %v245
      %255 = vmatmul.bf16.gmra.mxu0 %v232
      %v256 = vpop.f32.mrf.mxu0
      %v257 = vadd.f32 0.0, %v256
      %v258 = vpop.f32.mrf.mxu0
      %v259 = vadd.f32 0.0, %v258
      %260 = vmatmul.bf16.gmra.mxu0 %v235
      %v261 = vpop.f32.mrf.mxu0
      %v262 = vadd.f32 0.0, %v261
      %v263 = vpop.f32.mrf.mxu0
      %v264 = vadd.f32 0.0, %v263
      %265 = vmatmul.bf16.gmra.mxu0 %v238
      %v266 = vpop.f32.mrf.mxu0
      %v267 = vadd.f32 0.0, %v266
      %v268 = vpop.f32.mrf.mxu0
      %v269 = vadd.f32 0.0, %v268
      %270 = vmatmul.bf16.gmra.mxu0 %v241
      %v271 = vpop.f32.mrf.mxu0
      %v272 = vadd.f32 0.0, %v271
      %v273 = vpop.f32.mrf.mxu0
      %v274 = vadd.f32 0.0, %v273
      %275 = vdwg.mxu0
      %v276 = vmax.f32 %v257, 0.0
      %v277 = vmax.f32 %v259, 0.0
      %v278 = vmax.f32 %v262, 0.0
      %v279 = vmax.f32 %v264, 0.0
      %v280 = vmax.f32 %v267, 0.0
      %v281 = vmax.f32 %v269, 0.0
      %v282 = vmax.f32 %v272, 0.0
      %v283 = vmax.f32 %v274, 0.0
      %v284 = vpack.c.bf16 %v277, %v276
      %v285 = vpack.c.bf16 %v279, %v278
      %v286 = vpack.c.bf16 %v281, %v280
      %v287 = vpack.c.bf16 %v283, %v282
      %v288 = vld [vmem:[%s2] sm:$0xf]
      %v289 = vld [vmem:[%s2 + $0x4] sm:$0xf]
      %v290 = vld [vmem:[%s2 + $0x8] sm:$0xf]
      %v291 = vld [vmem:[%s2 + $0xc] sm:$0xf]
      %v292 = vld [vmem:[%s2 + $0x10] sm:$0xf]
      %v293 = vld [vmem:[%s2 + $0x14] sm:$0xf]
      %v294 = vld [vmem:[%s2 + $0x18] sm:$0xf]
      %v295 = vld [vmem:[%s2 + $0x1c] sm:$0xf]
      %v304 = vunpack.c.l.b16 %v288
      %v305 = vunpack.c.l.b16 %v289
      %v306 = vunpack.c.l.b16 %v290
      %v307 = vunpack.c.l.b16 %v291
      %v308 = vunpack.c.l.b16 %v292
      %v309 = vunpack.c.l.b16 %v293
      %v310 = vunpack.c.l.b16 %v294
      %v311 = vunpack.c.l.b16 %v295
      %v312 = vpack.c.b16 %v305, %v304
      %v313 = vpack.c.b16 %v307, %v306
      %v314 = vpack.c.b16 %v309, %v308
      %v315 = vpack.c.b16 %v311, %v310
      %vm316 = vcmask 523264
      %v318 = vsel %vm316, %v312, 0
      %v321 = vsel %vm316, %v313, 0
      %v324 = vsel %vm316, %v314, 0
      %v327 = vsel %vm316, %v315, 0
      %329 = vmatpush.bf16.msra.mxu0 0
      %330 = vmatpush.bf16.msra.mxu0 0
      %331 = vmatpush.bf16.msra.mxu0 0
      %332 = vmatpush.bf16.msra.mxu0 0
      %333 = vmatpush.bf16.msra.mxu0 %v287
      %334 = vmatpush.bf16.msra.mxu0 %v286
      %335 = vmatpush.bf16.msra.mxu0 %v285
      %336 = vmatpush.bf16.msra.mxu0 %v284
      %337 = vmatmul.bf16.gmra.mxu0 %v318
      %v338 = vpop.f32.mrf.mxu0
      %v339 = vadd.f32 0.0, %v338
      %v340 = vpop.f32.mrf.mxu0
      %v341 = vadd.f32 0.0, %v340
      %342 = vmatmul.bf16.gmra.mxu0 %v321
      %v343 = vpop.f32.mrf.mxu0
      %v344 = vadd.f32 0.0, %v343
      %v345 = vpop.f32.mrf.mxu0
      %v346 = vadd.f32 0.0, %v345
      %347 = vmatmul.bf16.gmra.mxu0 %v324
      %v348 = vpop.f32.mrf.mxu0
      %v349 = vadd.f32 0.0, %v348
      %v350 = vpop.f32.mrf.mxu0
      %v351 = vadd.f32 0.0, %v350
      %352 = vmatmul.bf16.gmra.mxu0 %v327
      %v353 = vpop.f32.mrf.mxu0
      %v354 = vadd.f32 0.0, %v353
      %v355 = vpop.f32.mrf.mxu0
      %v356 = vadd.f32 0.0, %v355
      %357 = vdwg.mxu0
      %v358 = vmax.f32 %v339, 0.0
      %v359 = vmax.f32 %v341, 0.0
      %v360 = vmax.f32 %v344, 0.0
      %v361 = vmax.f32 %v346, 0.0
      %v362 = vmax.f32 %v349, 0.0
      %v363 = vmax.f32 %v351, 0.0
      %v364 = vmax.f32 %v354, 0.0
      %v365 = vmax.f32 %v356, 0.0
      %v366 = vpack.c.bf16 %v358, %v358
      %v367 = vpack.c.bf16 %v359, %v359
      %v368 = vpack.c.bf16 %v360, %v360
      %v369 = vpack.c.bf16 %v361, %v361
      %v370 = vpack.c.bf16 %v362, %v362
      %v371 = vpack.c.bf16 %v363, %v363
      %v372 = vpack.c.bf16 %v364, %v364
      %v373 = vpack.c.bf16 %v365, %v365
      %374 = vst [vmem:[%s198] sm:$0xf] %v366
      %375 = vst [vmem:[%s198 + $0x4] sm:$0xf] %v367
      %376 = vst [vmem:[%s198 + $0x8] sm:$0xf] %v368
      %377 = vst [vmem:[%s198 + $0xc] sm:$0xf] %v369
      %378 = vst [vmem:[%s198 + $0x10] sm:$0xf] %v370
      %379 = vst [vmem:[%s198 + $0x14] sm:$0xf] %v371
      %380 = vst [vmem:[%s198 + $0x18] sm:$0xf] %v372
      %381 = vst [vmem:[%s198 + $0x1c] sm:$0xf] %v373
      %p382 = scmp.lt.s32.totalorder %s18, 1
      %s383 = scalar_select %p382, %s18, 1
      %p384 = scmp.lt.s32.totalorder %s19, 0
      %s385 = scalar_select %p384, %s19, 0
      %s386 = smul.addr %s383, 8
      %s387 = sadd.s32 %s385, %s386
      %s388 = smul.addr %s387, 4
      %s389 = scalar_lea.vmem %s3, %s388
      // Predicated region
      $region33: #{my_model_forward.3} parent=31 // pred_check
        %p390 = pneg %p116
      $region34: #{my_model_forward.3} parent=31 // pred_check_branch
        %392 = sbr.rel (%p390) target = $region36
      $region35: #{my_model_forward.3} parent=31 // pred_region
        _
      $region36: #{my_model_forward.3} parent=31 // pred_fallthru
        _
    $region32: #{my_model_forward.3} parent=5 // pred_fallthru
      _
    %p393 = scmp.le.s32.totalorder 2, %s9
    // Predicated region
    $region37: #{my_model_forward.3} parent=5 // pred_check
      %p394 = pneg %p393
    $region38: #{my_model_forward.3} parent=5 // pred_check_branch
      %396 = sbr.rel (%p394) target = $region40
    $region39: #{my_model_forward.3} parent=5 // pred_region
      %s397 = ssub.s32 %s9, 2
      // Predicated region
      $region41: #{my_model_forward.3} parent=39 // pred_check
        %p398 = pneg %p122
      $region42: #{my_model_forward.3} parent=39 // pred_check_branch
        %400 = sbr.rel (%p398) target = $region44
      $region43: #{my_model_forward.3} parent=39 // pred_region
        %p401 = scmp.lt.s32.totalorder %s20, 1
        %s402 = scalar_select %p401, %s20, 1
        %p403 = scmp.lt.s32.totalorder %s21, 0
        %s404 = scalar_select %p403, %s21, 0
        %s405 = smul.addr %s402, 8
        %s406 = sadd.s32 %s404, %s405
        %s407 = smul.addr %s406, 4
        %s408 = scalar_lea.vmem %s3, %s407
      $region44: #{my_model_forward.3} parent=39 // pred_fallthru
        _
    $region40: #{my_model_forward.3} parent=5 // pred_fallthru
      _
  $region6: #{my_model_forward.3} parent=0 // loop_footer
    %s13 = sadd.s32 1, %s9
  $region7: #{my_model_forward.3} parent=0 // loop_footer_branch
    %8 = sbr.rel target = $region3
  $region8: #{my_model_forward.3} parent=0 // loop_exit
    _

// kernel: my_model_forward.5
$region0: #{my_model_forward.5}
  #allocation0 [shape = 'u32[]', space=smem, size = 0x4, offset = 0x4, fixed_abs, tag = 'smem constant byte address 0x4 - core index']
  #allocation1 [shape = 'u32[72,128]{1,0:T(1,128)}', space=vmem, size = 0x9000, scoped, tag = 'internal scratch']
  %s0 = inlined_call_operand.vmem [shape: f32[2,3,8,8], index: 0, kind: input, shape index: {}]
  %s1 = inlined_call_operand.vmem [shape: f32[16,8], index: 1, kind: input, shape index: {}]
  %s2 = inlined_call_operand.vmem [shape: f32[8,16], index: 2, kind: input, shape index: {}]
  %s3 = inlined_call_operand.vmem [shape: f32[2,3,16,16], index: 3, kind: input, shape index: {}]
  %s4 = inlined_call_operand.hbm [shape: f32[2,3,16,16], index: 4, kind: output, shape index: {}]
  %s5 = sld [smem:[#allocation0]]
  $region49: #{my_model_forward.5} parent=0
    _
  %s7 = ssub.s32 1, %s5
  %s8 = scalar_select 0, %s7, %s5
  $region1: #{my_model_forward.5} parent=0
    #allocation2 [shape = 'u8[49152]{0}', space=vmem, size = 0xc000, scoped, tag = 'output window, operand 0']
    #allocation3 [shape = 's32[2]{0}', space=sflag, size = 0x8, scoped, tag = 'scoped memory for my_model_forward.5']
    %9 = vsyncpa [#allocation3], 0
    %s10 = scalar_lea.sflag [#allocation3], 1
    %11 = vsyncpa %s10, 0
    loop: start=0, step=1, limit=4
    $region2: #{my_model_forward.5} parent=1 // loop_pre_header
      _
    $region3: #{my_model_forward.5} parent=1 // loop_header
      %s13 = sphi 0, %s17
      %p14 = scmp.ge.s32.totalorder %s13, 4
      %s23 = sphi 0, %s25
      %s26 = sphi 0, %s23
      %s27 = sphi 0, %s26
      %s43 = sphi 0, %s27
      %s47 = sphi 0, %s47
      %s49 = sphi 0, %s47
      %s50 = sphi 0, %s49
      %s64 = sphi 0, %s50
      %s68 = sphi 0, %s68
      %s70 = sphi 0, %s68
      %s71 = sphi 0, %s70
      %s85 = sphi 0, %s71
      %s91 = sphi 0, %s93
      %s94 = sphi 0, %s91
      %s95 = sphi 0, %s94
      %s111 = sphi 0, %s95
      %s117 = sphi 0, %s119
      %s120 = sphi 0, %s117
      %s121 = sphi 0, %s120
      %s137 = sphi 0, %s121
    $region4: #{my_model_forward.5} parent=1 // loop_header_branch
      %16 = sbr.rel (%p14) target = $region8
    $region5: #{my_model_forward.5} parent=1 // loop_body
      %s18 = ssub.s32 %s13, 1
      %s19 = ssub.s32 %s13, 2
      %s20 = sadd.s32 %s13, 1
      %s21 = ssub.s32 %s13, %s20
      %p22 = scmp.eq.s32.totalorder %s21, 0
      %s24 = sadd.s32 %s23, 1
      %s25 = scalar_select %p22, %s23, %s24
      %p28 = pneg %p22
      %p29 = scmp.eq.s32.totalorder %s13, 1
      %p30 = por %p28, %p29
      %p31 = scmp.ne.s32.totalorder %s23, %s26
      %p32 = scmp.eq.s32.totalorder %s13, 0
      %p33 = por %p31, %p32
      %p34 = scmp.ne.s32.totalorder %s23, %s26
      %p35 = scmp.eq.s32.totalorder %s18, 1
      %p36 = por %p34, %p35
      %p37 = scmp.ne.s32.totalorder %s26, %s27
      %p38 = scmp.eq.s32.totalorder %s18, 0
      %p39 = por %p37, %p38
      %p40 = scmp.ne.s32.totalorder %s26, %s27
      %p41 = scmp.eq.s32.totalorder %s19, 1
      %p42 = por %p40, %p41
      %p44 = scmp.ne.s32.totalorder %s27, %s43
      %p45 = scmp.eq.s32.totalorder %s19, 0
      %p46 = por %p44, %p45
      %s48 = sadd.s32 %s47, 1
      %p51 = scmp.eq.s32.totalorder %s13, 1
      %p52 = scmp.ne.s32.totalorder %s47, %s49
      %p53 = scmp.eq.s32.totalorder %s13, 0
      %p54 = por %p52, %p53
      %p55 = scmp.ne.s32.totalorder %s47, %s49
      %p56 = scmp.eq.s32.totalorder %s18, 1
      %p57 = por %p55, %p56
      %p58 = scmp.ne.s32.totalorder %s49, %s50
      %p59 = scmp.eq.s32.totalorder %s18, 0
      %p60 = por %p58, %p59
      %p61 = scmp.ne.s32.totalorder %s49, %s50
      %p62 = scmp.eq.s32.totalorder %s19, 1
      %p63 = por %p61, %p62
      %p65 = scmp.ne.s32.totalorder %s50, %s64
      %p66 = scmp.eq.s32.totalorder %s19, 0
      %p67 = por %p65, %p66
      %s69 = sadd.s32 %s68, 1
      %p72 = scmp.eq.s32.totalorder %s13, 1
      %p73 = scmp.ne.s32.totalorder %s68, %s70
      %p74 = scmp.eq.s32.totalorder %s13, 0
      %p75 = por %p73, %p74
      %p76 = scmp.ne.s32.totalorder %s68, %s70
      %p77 = scmp.eq.s32.totalorder %s18, 1
      %p78 = por %p76, %p77
      %p79 = scmp.ne.s32.totalorder %s70, %s71
      %p80 = scmp.eq.s32.totalorder %s18, 0
      %p81 = por %p79, %p80
      %p82 = scmp.ne.s32.totalorder %s70, %s71
      %p83 = scmp.eq.s32.totalorder %s19, 1
      %p84 = por %p82, %p83
      %p86 = scmp.ne.s32.totalorder %s71, %s85
      %p87 = scmp.eq.s32.totalorder %s19, 0
      %p88 = por %p86, %p87
      %s89 = ssub.s32 %s13, %s20
      %p90 = scmp.eq.s32.totalorder %s89, 0
      %s92 = sadd.s32 %s91, 1
      %s93 = scalar_select %p90, %s91, %s92
      %p96 = pneg %p90
      %p97 = scmp.eq.s32.totalorder %s13, 1
      %p98 = por %p96, %p97
      %p99 = scmp.ne.s32.totalorder %s91, %s94
      %p100 = scmp.eq.s32.totalorder %s13, 0
      %p101 = por %p99, %p100
      %p102 = scmp.ne.s32.totalorder %s91, %s94
      %p103 = scmp.eq.s32.totalorder %s18, 1
      %p104 = por %p102, %p103
      %p105 = scmp.ne.s32.totalorder %s94, %s95
      %p106 = scmp.eq.s32.totalorder %s18, 0
      %p107 = por %p105, %p106
      %p108 = scmp.ne.s32.totalorder %s94, %s95
      %p109 = scmp.eq.s32.totalorder %s19, 1
      %p110 = por %p108, %p109
      %p112 = scmp.ne.s32.totalorder %s95, %s111
      %p113 = scmp.eq.s32.totalorder %s19, 0
      %p114 = por %p112, %p113
      %s115 = ssub.s32 %s13, %s20
      %p116 = scmp.eq.s32.totalorder %s115, 0
      %s118 = sadd.s32 %s117, 1
      %s119 = scalar_select %p116, %s117, %s118
      %p122 = pneg %p116
      %p123 = scmp.eq.s32.totalorder %s13, 1
      %p124 = por %p122, %p123
      %p125 = scmp.ne.s32.totalorder %s117, %s120
      %p126 = scmp.eq.s32.totalorder %s13, 0
      %p127 = por %p125, %p126
      %p128 = scmp.ne.s32.totalorder %s117, %s120
      %p129 = scmp.eq.s32.totalorder %s18, 1
      %p130 = por %p128, %p129
      %p131 = scmp.ne.s32.totalorder %s120, %s121
      %p132 = scmp.eq.s32.totalorder %s18, 0
      %p133 = por %p131, %p132
      %p134 = scmp.ne.s32.totalorder %s120, %s121
      %p135 = scmp.eq.s32.totalorder %s19, 1
      %p136 = por %p134, %p135
      %p138 = scmp.ne.s32.totalorder %s121, %s137
      %p139 = scmp.eq.s32.totalorder %s19, 0
      %p140 = por %p138, %p139
      %p141 = scmp.le.s32.totalorder 1, %s13
      %p142 = scmp.lt.s32.totalorder %s13, 3
      %p143 = pnand %p141, %p142
      %p144 = pneg %p143
      // Predicated region
      $region9: #{my_model_forward.5} parent=5 // pred_check
        _
      $region10: #{my_model_forward.5} parent=5 // pred_check_branch
        %146 = sbr.rel (%p143) target = $region12
      $region11: #{my_model_forward.5} parent=5 // pred_region
        %s147 = ssub.s32 %s13, 1
        // Predicated region
        $region13: #{my_model_forward.5} parent=11 // pred_check
          %p148 = pneg %p60
        $region14: #{my_model_forward.5} parent=11 // pred_check_branch
          %150 = sbr.rel (%p148) target = $region16
        $region15: #{my_model_forward.5} parent=11 // pred_region
          _
        $region16: #{my_model_forward.5} parent=11 // pred_fallthru
          _
        // Predicated region
        $region17: #{my_model_forward.5} parent=11 // pred_check
          %p151 = pneg %p81
        $region18: #{my_model_forward.5} parent=11 // pred_check_branch
          %153 = sbr.rel (%p151) target = $region20
        $region19: #{my_model_forward.5} parent=11 // pred_region
          _
        $region20: #{my_model_forward.5} parent=11 // pred_fallthru
          _
      $region12: #{my_model_forward.5} parent=5 // pred_fallthru
        _
      %p154 = scmp.lt.s32.totalorder %s13, 2
      // Predicated region
      $region21: #{my_model_forward.5} parent=5 // pred_check
        %p155 = pneg %p154
      $region22: #{my_model_forward.5} parent=5 // pred_check_branch
        %157 = sbr.rel (%p155) target = $region24
      $region23: #{my_model_forward.5} parent=5 // pred_region
        // Predicated region
        $region25: #{my_model_forward.5} parent=23 // pred_check
          %p158 = pneg %p33
        $region26: #{my_model_forward.5} parent=23 // pred_check_branch
          %160 = sbr.rel (%p158) target = $region28
        $region27: #{my_model_forward.5} parent=23 // pred_region
          %p161 = scmp.lt.s32.totalorder %s13, 1
          %s162 = scalar_select %p161, %s13, 1
          %s163 = smul.addr %s162, 3
          %s164 = smul.addr %s163, 8
          %s165 = scalar_lea.vmem %s0, %s164
        $region28: #{my_model_forward.5} parent=23 // pred_fallthru
          _
        // Predicated region
        $region29: #{my_model_forward.5} parent=23 // pred_check
          %p166 = pneg %p101
        $region30: #{my_model_forward.5} parent=23 // pred_check_branch
          %168 = sbr.rel (%p166) target = $region32
        $region31: #{my_model_forward.5} parent=23 // pred_region
          %p169 = scmp.lt.s32.totalorder %s13, 1
          %s170 = scalar_select %p169, %s13, 1
          %s171 = smul.addr %s170, 6
          %s172 = smul.addr %s171, 8
          %s173 = scalar_lea.vmem %s3, %s172
        $region32: #{my_model_forward.5} parent=23 // pred_fallthru
          _
      $region24: #{my_model_forward.5} parent=5 // pred_fallthru
        _
      %p174 = scmp.le.s32.totalorder 1, %s13
      %p175 = scmp.lt.s32.totalorder %s13, 3
      %p176 = pnand %p174, %p175
      %p177 = pneg %p176
      // Predicated region
      $region33: #{my_model_forward.5} parent=5 // pred_check
        _
      $region34: #{my_model_forward.5} parent=5 // pred_check_branch
        %179 = sbr.rel (%p176) target = $region36
      $region35: #{my_model_forward.5} parent=5 // pred_region
        %s180 = ssub.s32 %s13, 1
        %p181 = scmp.lt.s32.totalorder %s18, 1
        %s182 = scalar_select %p181, %s18, 1
        %s183 = smul.addr %s182, 3
        %s184 = smul.addr %s183, 8
        %s185 = scalar_lea.vmem %s0, %s184
        %p186 = pneg %p39
        %p187 = pneg %p36
        %p188 = pneg %p60
        %p189 = pneg %p57
        %p190 = pneg %p81
        %p191 = pneg %p78
        %p192 = scmp.lt.s32.totalorder %s18, 1
        %s193 = scalar_select %p192, %s18, 1
        %s194 = smul.addr %s193, 6
        %s195 = smul.addr %s194, 8
        %s196 = scalar_lea.vmem %s3, %s195
        %p197 = pneg %p107
        %p198 = pneg %p104
        %p199 = pneg %p133
        %p200 = pneg %p130
        %s201 = sand.u32 %s120, 1
        %s202 = scalar_lea.sflag [#allocation3], %s201
        %s203 = sand.u32 %s120, 1
        %s204 = smul.addr %s203, 48
        %s205 = scalar_lea.vmem [#allocation2], %s204
        %p206 = scmp.lt.s32.totalorder %s18, 1
        %s207 = scalar_select %p206, %s18, 1
        %s208 = smul.addr %s207, 3
        %s209 = smul.addr %s208, 8
        %s210 = scalar_lea.vmem %s0, %s209
        %p211 = scmp.lt.s32.totalorder %s18, 1
        %s212 = scalar_select %p211, %s18, 1
        %s213 = smul.addr %s212, 6
        %s214 = smul.addr %s213, 8
        %s215 = scalar_lea.vmem %s3, %s214
        %v216 = vld [vmem:[%s210] sm:$0xff]
        %v217 = vld [vmem:[%s2] sm:$0xff]
        %vm218 = vcmask 64512
        %v220 = vsel %vm218, %v216, 0
        %222 = vmatpush.msra.mxu0 0.0
        %223 = vmatpush.msra.mxu0 0.0
        %224 = vmatpush.msra.mxu0 0.0
        %225 = vmatpush.msra.mxu0 0.0
        %226 = vmatpush.msra.mxu0 0.0
        %227 = vmatpush.msra.mxu0 0.0
        %228 = vmatpush.msra.mxu0 0.0
        %229 = vmatpush.msra.mxu0 0.0
        %230 = vmatpush.msra.mxu0 0.0
        %231 = vmatpush.msra.mxu0 0.0
        %232 = vmatpush.msra.mxu0 0.0
        %233 = vmatpush.msra.mxu0 0.0
        %234 = vmatpush.msra.mxu0 0.0
        %235 = vmatpush.msra.mxu0 0.0
        %236 = vmatpush.msra.mxu0 0.0
        %237 = vmatpush.msra.mxu0 %v217
        %238 = vmatmul.f32.gmra.mxu0 %v220
        %v239 = vpop.f32.mrf.mxu0
        %v240 = vadd.f32 0.0, %v239
        %241 = vdwg.mxu0
        %v242 = vld [vmem:[%s1] sm:$0xff]
        %v243 = vld [vmem:[%s1 + $0x8] sm:$0xff]
        %v244 = vld [vmem:[%s215] sm:$0xff]
        %v245 = vld [vmem:[%s215 + $0x8] sm:$0xff]
        %v247 = vsel %vm218, %v242, 0
        %v250 = vsel %vm218, %v243, 0
        %252 = vmatpush.msra.mxu0 0.0
        %253 = vmatpush.msra.mxu0 0.0
        %254 = vmatpush.msra.mxu0 0.0
        %255 = vmatpush.msra.mxu0 0.0
        %256 = vmatpush.msra.mxu0 0.0
        %257 = vmatpush.msra.mxu0 0.0
        %258 = vmatpush.msra.mxu0 0.0
        %259 = vmatpush.msra.mxu0 0.0
        %260 = vmatpush.msra.mxu0 0.0
        %261 = vmatpush.msra.mxu0 0.0
        %262 = vmatpush.msra.mxu0 0.0
        %263 = vmatpush.msra.mxu0 0.0
        %264 = vmatpush.msra.mxu0 0.0
        %265 = vmatpush.msra.mxu0 0.0
        %266 = vmatpush.msra.mxu0 0.0
        %267 = vmatpush.msra.mxu0 %v240
        %268 = vmatmul.f32.gmra.mxu0 %v247
        %v269 = vpop.f32.mrf.mxu0
        %v270 = vadd.f32 %v244, %v269
        %271 = vmatmul.f32.gmra.mxu0 %v250
        %v272 = vpop.f32.mrf.mxu0
        %v273 = vadd.f32 %v245, %v272
        %274 = vdwg.mxu0
        %vm275 = vcmask 130048
        %276 = vst.msk [vmem:[%s205] sm:$0xff] %vm275, %v270
        %277 = vst.msk [vmem:[%s205 + $0x8] sm:$0xff] %vm275, %v273
        %s278 = scalar_lea.vmem %s210, 8
        %v279 = vld [vmem:[%s278] sm:$0xff]
        %v280 = vld [vmem:[%s2] sm:$0xff]
        %v282 = vsel %vm218, %v279, 0
        %284 = vmatpush.msra.mxu0 0.0
        %285 = vmatpush.msra.mxu0 0.0
        %286 = vmatpush.msra.mxu0 0.0
        %287 = vmatpush.msra.mxu0 0.0
        %288 = vmatpush.msra.mxu0 0.0
        %289 = vmatpush.msra.mxu0 0.0
        %290 = vmatpush.msra.mxu0 0.0
        %291 = vmatpush.msra.mxu0 0.0
        %292 = vmatpush.msra.mxu0 0.0
        %293 = vmatpush.msra.mxu0 0.0
        %294 = vmatpush.msra.mxu0 0.0
        %295 = vmatpush.msra.mxu0 0.0
        %296 = vmatpush.msra.mxu0 0.0
        %297 = vmatpush.msra.mxu0 0.0
        %298 = vmatpush.msra.mxu0 0.0
        %299 = vmatpush.msra.mxu0 %v280
        %300 = vmatmul.f32.gmra.mxu0 %v282
        %v301 = vpop.f32.mrf.mxu0
        %v302 = vadd.f32 0.0, %v301
        %303 = vdwg.mxu0
        %v304 = vld [vmem:[%s1] sm:$0xff]
        %v305 = vld [vmem:[%s1 + $0x8] sm:$0xff]
        %s306 = scalar_lea.vmem %s215, 16
        %v307 = vld [vmem:[%s306] sm:$0xff]
        %v308 = vld [vmem:[%s306 + $0x8] sm:$0xff]
        %v310 = vsel %vm218, %v304, 0
        %v313 = vsel %vm218, %v305, 0
        %315 = vmatpush.msra.mxu0 0.0
        %316 = vmatpush.msra.mxu0 0.0
        %317 = vmatpush.msra.mxu0 0.0
        %318 = vmatpush.msra.mxu0 0.0
        %319 = vmatpush.msra.mxu0 0.0
        %320 = vmatpush.msra.mxu0 0.0
        %321 = vmatpush.msra.mxu0 0.0
        %322 = vmatpush.msra.mxu0 0.0
        %323 = vmatpush.msra.mxu0 0.0
        %324 = vmatpush.msra.mxu0 0.0
        %325 = vmatpush.msra.mxu0 0.0
        %326 = vmatpush.msra.mxu0 0.0
        %327 = vmatpush.msra.mxu0 0.0
        %328 = vmatpush.msra.mxu0 0.0
        %329 = vmatpush.msra.mxu0 0.0
        %330 = vmatpush.msra.mxu0 %v302
        %331 = vmatmul.f32.gmra.mxu0 %v310
        %v332 = vpop.f32.mrf.mxu0
        %v333 = vadd.f32 %v307, %v332
        %334 = vmatmul.f32.gmra.mxu0 %v313
        %v335 = vpop.f32.mrf.mxu0
        %v336 = vadd.f32 %v308, %v335
        %337 = vdwg.mxu0
        %s338 = scalar_lea.vmem %s205, 16 [#allocation2]
        %339 = vst.msk [vmem:[%s338] sm:$0xff] %vm275, %v333
        %340 = vst.msk [vmem:[%s338 + $0x8] sm:$0xff] %vm275, %v336
        %s341 = scalar_lea.vmem %s210, 16
        %v342 = vld [vmem:[%s341] sm:$0xff]
        %v343 = vld [vmem:[%s2] sm:$0xff]
        %v345 = vsel %vm218, %v342, 0
        %347 = vmatpush.msra.mxu0 0.0
        %348 = vmatpush.msra.mxu0 0.0
        %349 = vmatpush.msra.mxu0 0.0
        %350 = vmatpush.msra.mxu0 0.0
        %351 = vmatpush.msra.mxu0 0.0
        %352 = vmatpush.msra.mxu0 0.0
        %353 = vmatpush.msra.mxu0 0.0
        %354 = vmatpush.msra.mxu0 0.0
        %355 = vmatpush.msra.mxu0 0.0
        %356 = vmatpush.msra.mxu0 0.0
        %357 = vmatpush.msra.mxu0 0.0
        %358 = vmatpush.msra.mxu0 0.0
        %359 = vmatpush.msra.mxu0 0.0
        %360 = vmatpush.msra.mxu0 0.0
        %361 = vmatpush.msra.mxu0 0.0
        %362 = vmatpush.msra.mxu0 %v343
        %363 = vmatmul.f32.gmra.mxu0 %v345
        %v364 = vpop.f32.mrf.mxu0
        %v365 = vadd.f32 0.0, %v364
        %366 = vdwg.mxu0
        %v367 = vld [vmem:[%s1] sm:$0xff]
        %v368 = vld [vmem:[%s1 + $0x8] sm:$0xff]
        %s369 = scalar_lea.vmem %s215, 32
        %v370 = vld [vmem:[%s369] sm:$0xff]
        %v371 = vld [vmem:[%s369 + $0x8] sm:$0xff]
        %v373 = vsel %vm218, %v367, 0
        %v376 = vsel %vm218, %v368, 0
        %378 = vmatpush.msra.mxu0 0.0
        %379 = vmatpush.msra.mxu0 0.0
        %380 = vmatpush.msra.mxu0 0.0
        %381 = vmatpush.msra.mxu0 0.0
        %382 = vmatpush.msra.mxu0 0.0
        %383 = vmatpush.msra.mxu0 0.0
        %384 = vmatpush.msra.mxu0 0.0
        %385 = vmatpush.msra.mxu0 0.0
        %386 = vmatpush.msra.mxu0 0.0
        %387 = vmatpush.msra.mxu0 0.0
        %388 = vmatpush.msra.mxu0 0.0
        %389 = vmatpush.msra.mxu0 0.0
        %390 = vmatpush.msra.mxu0 0.0
        %391 = vmatpush.msra.mxu0 0.0
        %392 = vmatpush.msra.mxu0 0.0
        %393 = vmatpush.msra.mxu0 %v365
        %394 = vmatmul.f32.gmra.mxu0 %v373
        %v395 = vpop.f32.mrf.mxu0
        %v396 = vadd.f32 %v370, %v395
        %397 = vmatmul.f32.gmra.mxu0 %v376
        %v398 = vpop.f32.mrf.mxu0
        %v399 = vadd.f32 %v371, %v398
        %400 = vdwg.mxu0
        %s401 = scalar_lea.vmem %s205, 32 [#allocation2]
        %402 = vst.msk [vmem:[%s401] sm:$0xff] %vm275, %v396
        %403 = vst.msk [vmem:[%s401 + $0x8] sm:$0xff] %vm275, %v399
        %s404 = sand.u32 %s120, 1
        %s405 = scalar_lea.sflag [#allocation3], %s404
        %s406 = sand.u32 %s120, 1
        %s407 = smul.addr %s406, 48
        %s408 = scalar_lea.vmem [#allocation2], %s407
        // Predicated region
        $region37: #{my_model_forward.5} parent=35 // pred_check
          %p409 = pneg %p130
        $region38: #{my_model_forward.5} parent=35 // pred_check_branch
          %411 = sbr.rel (%p409) target = $region40
        $region39: #{my_model_forward.5} parent=35 // pred_region
          %413 = vsyncadd %s405, 0
          %s414 = smul.addr %s18, 6
          %s415 = smul.addr %s414, 8
          %s416 = scalar_lea.hbm %s4, %s415
          %s417 = sshll.u32 %s408, 4
          %s418 = int_to_ptr.vmem [resolvable:$true] %s417
          %s419 = sshll.u32 %s416, 4
          %s420 = int_to_ptr.hbm [resolvable:$true] %s419
          %425 = dma.vmem_to_hbm [thread:$0]  %s418, 768, %s420, %s405, 128, 128, 8
        $region40: #{my_model_forward.5} parent=35 // pred_fallthru
          _
      $region36: #{my_model_forward.5} parent=5 // pred_fallthru
        _
      %p426 = scmp.le.s32.totalorder 2, %s13
      // Predicated region
      $region41: #{my_model_forward.5} parent=5 // pred_check
        %p427 = pneg %p426
      $region42: #{my_model_forward.5} parent=5 // pred_check_branch
        %429 = sbr.rel (%p427) target = $region44
      $region43: #{my_model_forward.5} parent=5 // pred_region
        %s430 = ssub.s32 %s13, 2
        // Predicated region
        $region45: #{my_model_forward.5} parent=43 // pred_check
          %p431 = pneg %p136
        $region46: #{my_model_forward.5} parent=43 // pred_check_branch
          %433 = sbr.rel (%p431) target = $region48
        $region47: #{my_model_forward.5} parent=43 // pred_region
          %s434 = sand.u32 %s121, 1
          %s435 = scalar_lea.sflag [#allocation3], %s434
          %s436 = sand.u32 %s121, 1
          %s437 = smul.addr %s436, 48
          %s438 = scalar_lea.vmem [#allocation2], %s437
          %440 = dma.done %s435, 768
        $region48: #{my_model_forward.5} parent=43 // pred_fallthru
          _
      $region44: #{my_model_forward.5} parent=5 // pred_fallthru
        _
    $region6: #{my_model_forward.5} parent=1 // loop_footer
      %s17 = sadd.s32 1, %s13
    $region7: #{my_model_forward.5} parent=1 // loop_footer_branch
      %12 = sbr.rel target = $region3
    $region8: #{my_model_forward.5} parent=1 // loop_exit
      _
    %441 = vsyncpa [#allocation3], 1
    %s442 = scalar_lea.sflag [#allocation3], 1
    %443 = vsyncpa %s442, 1

// kernel: my_model_forward.4
$region0: #{my_model_forward.4}
  #allocation0 [shape = 'u32[]', space=smem, size = 0x4, offset = 0x4, fixed_abs, tag = 'smem constant byte address 0x4 - core index']
  #allocation1 [shape = 'u32[72,128]{1,0:T(1,128)}', space=vmem, size = 0x9000, scoped, tag = 'internal scratch']
  %s0 = inlined_call_operand.vmem [shape: bf16[2,64,128], index: 0, kind: input, shape index: {}]
  %s1 = inlined_call_operand.vmem [shape: bf16[32,64], index: 1, kind: input, shape index: {}]
  %s2 = inlined_call_operand.vmem [shape: f32[32,1], index: 2, kind: input, shape index: {}]
  %s3 = inlined_call_operand.vmem [shape: f32[9,32,1], index: 3, kind: input, shape index: {}]
  %s4 = inlined_call_operand.vmem [shape: f32[32,1], index: 4, kind: input, shape index: {}]
  %s5 = inlined_call_operand.vmem [shape: bf16[3,32], index: 5, kind: input, shape index: {}]
  %s6 = inlined_call_operand.vmem [shape: f32[3,1], index: 6, kind: input, shape index: {}]
  %s7 = inlined_call_operand.vmem [shape: f32[9,1,128], index: 7, kind: input, shape index: {}]
  %s8 = inlined_call_operand.vmem [shape: f32[2,3,128], index: 8, kind: output, shape index: {}]
  %s9 = sld [smem:[#allocation0]]
  $region65: #{my_model_forward.4} parent=0
    _
  %s11 = ssub.s32 1, %s9
  %s12 = scalar_select 0, %s11, %s9
  loop: start=0, step=1, limit=4
  $region2: #{my_model_forward.4} parent=0 // loop_pre_header
    _
  $region3: #{my_model_forward.4} parent=0 // loop_header
    %s14 = sphi 0, %s18
    %p15 = scmp.ge.s32.totalorder %s14, 4
    %s24 = sphi 0, %s26
    %s27 = sphi 0, %s24
    %s28 = sphi 0, %s27
    %s44 = sphi 0, %s28
    %s48 = sphi 0, %s48
    %s50 = sphi 0, %s48
    %s51 = sphi 0, %s50
    %s65 = sphi 0, %s51
    %s69 = sphi 0, %s69
    %s71 = sphi 0, %s69
    %s72 = sphi 0, %s71
    %s86 = sphi 0, %s72
    %s90 = sphi 0, %s90
    %s92 = sphi 0, %s90
    %s93 = sphi 0, %s92
    %s107 = sphi 0, %s93
    %s111 = sphi 0, %s111
    %s113 = sphi 0, %s111
    %s114 = sphi 0, %s113
    %s128 = sphi 0, %s114
    %s132 = sphi 0, %s132
    %s134 = sphi 0, %s132
    %s135 = sphi 0, %s134
    %s149 = sphi 0, %s135
    %s153 = sphi 0, %s153
    %s155 = sphi 0, %s153
    %s156 = sphi 0, %s155
    %s170 = sphi 0, %s156
    %s174 = sphi 0, %s174
    %s176 = sphi 0, %s174
    %s177 = sphi 0, %s176
    %s191 = sphi 0, %s177
    %s197 = sphi 0, %s199
    %s200 = sphi 0, %s197
    %s201 = sphi 0, %s200
    %s217 = sphi 0, %s201
  $region4: #{my_model_forward.4} parent=0 // loop_header_branch
    %17 = sbr.rel (%p15) target = $region8
  $region5: #{my_model_forward.4} parent=0 // loop_body
    %s19 = ssub.s32 %s14, 1
    %s20 = ssub.s32 %s14, 2
    %s21 = sadd.s32 %s14, 1
    %s22 = ssub.s32 %s14, %s21
    %p23 = scmp.eq.s32.totalorder %s22, 0
    %s25 = sadd.s32 %s24, 1
    %s26 = scalar_select %p23, %s24, %s25
    %p29 = pneg %p23
    %p30 = scmp.eq.s32.totalorder %s14, 1
    %p31 = por %p29, %p30
    %p32 = scmp.ne.s32.totalorder %s24, %s27
    %p33 = scmp.eq.s32.totalorder %s14, 0
    %p34 = por %p32, %p33
    %p35 = scmp.ne.s32.totalorder %s24, %s27
    %p36 = scmp.eq.s32.totalorder %s19, 1
    %p37 = por %p35, %p36
    %p38 = scmp.ne.s32.totalorder %s27, %s28
    %p39 = scmp.eq.s32.totalorder %s19, 0
    %p40 = por %p38, %p39
    %p41 = scmp.ne.s32.totalorder %s27, %s28
    %p42 = scmp.eq.s32.totalorder %s20, 1
    %p43 = por %p41, %p42
    %p45 = scmp.ne.s32.totalorder %s28, %s44
    %p46 = scmp.eq.s32.totalorder %s20, 0
    %p47 = por %p45, %p46
    %s49 = sadd.s32 %s48, 1
    %p52 = scmp.eq.s32.totalorder %s14, 1
    %p53 = scmp.ne.s32.totalorder %s48, %s50
    %p54 = scmp.eq.s32.totalorder %s14, 0
    %p55 = por %p53, %p54
    %p56 = scmp.ne.s32.totalorder %s48, %s50
    %p57 = scmp.eq.s32.totalorder %s19, 1
    %p58 = por %p56, %p57
    %p59 = scmp.ne.s32.totalorder %s50, %s51
    %p60 = scmp.eq.s32.totalorder %s19, 0
    %p61 = por %p59, %p60
    %p62 = scmp.ne.s32.totalorder %s50, %s51
    %p63 = scmp.eq.s32.totalorder %s20, 1
    %p64 = por %p62, %p63
    %p66 = scmp.ne.s32.totalorder %s51, %s65
    %p67 = scmp.eq.s32.totalorder %s20, 0
    %p68 = por %p66, %p67
    %s70 = sadd.s32 %s69, 1
    %p73 = scmp.eq.s32.totalorder %s14, 1
    %p74 = scmp.ne.s32.totalorder %s69, %s71
    %p75 = scmp.eq.s32.totalorder %s14, 0
    %p76 = por %p74, %p75
    %p77 = scmp.ne.s32.totalorder %s69, %s71
    %p78 = scmp.eq.s32.totalorder %s19, 1
    %p79 = por %p77, %p78
    %p80 = scmp.ne.s32.totalorder %s71, %s72
    %p81 = scmp.eq.s32.totalorder %s19, 0
    %p82 = por %p80, %p81
    %p83 = scmp.ne.s32.totalorder %s71, %s72
    %p84 = scmp.eq.s32.totalorder %s20, 1
    %p85 = por %p83, %p84
    %p87 = scmp.ne.s32.totalorder %s72, %s86
    %p88 = scmp.eq.s32.totalorder %s20, 0
    %p89 = por %p87, %p88
    %s91 = sadd.s32 %s90, 1
    %p94 = scmp.eq.s32.totalorder %s14, 1
    %p95 = scmp.ne.s32.totalorder %s90, %s92
    %p96 = scmp.eq.s32.totalorder %s14, 0
    %p97 = por %p95, %p96
    %p98 = scmp.ne.s32.totalorder %s90, %s92
    %p99 = scmp.eq.s32.totalorder %s19, 1
    %p100 = por %p98, %p99
    %p101 = scmp.ne.s32.totalorder %s92, %s93
    %p102 = scmp.eq.s32.totalorder %s19, 0
    %p103 = por %p101, %p102
    %p104 = scmp.ne.s32.totalorder %s92, %s93
    %p105 = scmp.eq.s32.totalorder %s20, 1
    %p106 = por %p104, %p105
    %p108 = scmp.ne.s32.totalorder %s93, %s107
    %p109 = scmp.eq.s32.totalorder %s20, 0
    %p110 = por %p108, %p109
    %s112 = sadd.s32 %s111, 1
    %p115 = scmp.eq.s32.totalorder %s14, 1
    %p116 = scmp.ne.s32.totalorder %s111, %s113
    %p117 = scmp.eq.s32.totalorder %s14, 0
    %p118 = por %p116, %p117
    %p119 = scmp.ne.s32.totalorder %s111, %s113
    %p120 = scmp.eq.s32.totalorder %s19, 1
    %p121 = por %p119, %p120
    %p122 = scmp.ne.s32.totalorder %s113, %s114
    %p123 = scmp.eq.s32.totalorder %s19, 0
    %p124 = por %p122, %p123
    %p125 = scmp.ne.s32.totalorder %s113, %s114
    %p126 = scmp.eq.s32.totalorder %s20, 1
    %p127 = por %p125, %p126
    %p129 = scmp.ne.s32.totalorder %s114, %s128
    %p130 = scmp.eq.s32.totalorder %s20, 0
    %p131 = por %p129, %p130
    %s133 = sadd.s32 %s132, 1
    %p136 = scmp.eq.s32.totalorder %s14, 1
    %p137 = scmp.ne.s32.totalorder %s132, %s134
    %p138 = scmp.eq.s32.totalorder %s14, 0
    %p139 = por %p137, %p138
    %p140 = scmp.ne.s32.totalorder %s132, %s134
    %p141 = scmp.eq.s32.totalorder %s19, 1
    %p142 = por %p140, %p141
    %p143 = scmp.ne.s32.totalorder %s134, %s135
    %p144 = scmp.eq.s32.totalorder %s19, 0
    %p145 = por %p143, %p144
    %p146 = scmp.ne.s32.totalorder %s134, %s135
    %p147 = scmp.eq.s32.totalorder %s20, 1
    %p148 = por %p146, %p147
    %p150 = scmp.ne.s32.totalorder %s135, %s149
    %p151 = scmp.eq.s32.totalorder %s20, 0
    %p152 = por %p150, %p151
    %s154 = sadd.s32 %s153, 1
    %p157 = scmp.eq.s32.totalorder %s14, 1
    %p158 = scmp.ne.s32.totalorder %s153, %s155
    %p159 = scmp.eq.s32.totalorder %s14, 0
    %p160 = por %p158, %p159
    %p161 = scmp.ne.s32.totalorder %s153, %s155
    %p162 = scmp.eq.s32.totalorder %s19, 1
    %p163 = por %p161, %p162
    %p164 = scmp.ne.s32.totalorder %s155, %s156
    %p165 = scmp.eq.s32.totalorder %s19, 0
    %p166 = por %p164, %p165
    %p167 = scmp.ne.s32.totalorder %s155, %s156
    %p168 = scmp.eq.s32.totalorder %s20, 1
    %p169 = por %p167, %p168
    %p171 = scmp.ne.s32.totalorder %s156, %s170
    %p172 = scmp.eq.s32.totalorder %s20, 0
    %p173 = por %p171, %p172
    %s175 = sadd.s32 %s174, 1
    %p178 = scmp.eq.s32.totalorder %s14, 1
    %p179 = scmp.ne.s32.totalorder %s174, %s176
    %p180 = scmp.eq.s32.totalorder %s14, 0
    %p181 = por %p179, %p180
    %p182 = scmp.ne.s32.totalorder %s174, %s176
    %p183 = scmp.eq.s32.totalorder %s19, 1
    %p184 = por %p182, %p183
    %p185 = scmp.ne.s32.totalorder %s176, %s177
    %p186 = scmp.eq.s32.totalorder %s19, 0
    %p187 = por %p185, %p186
    %p188 = scmp.ne.s32.totalorder %s176, %s177
    %p189 = scmp.eq.s32.totalorder %s20, 1
    %p190 = por %p188, %p189
    %p192 = scmp.ne.s32.totalorder %s177, %s191
    %p193 = scmp.eq.s32.totalorder %s20, 0
    %p194 = por %p192, %p193
    %s195 = ssub.s32 %s14, %s21
    %p196 = scmp.eq.s32.totalorder %s195, 0
    %s198 = sadd.s32 %s197, 1
    %s199 = scalar_select %p196, %s197, %s198
    %p202 = pneg %p196
    %p203 = scmp.eq.s32.totalorder %s14, 1
    %p204 = por %p202, %p203
    %p205 = scmp.ne.s32.totalorder %s197, %s200
    %p206 = scmp.eq.s32.totalorder %s14, 0
    %p207 = por %p205, %p206
    %p208 = scmp.ne.s32.totalorder %s197, %s200
    %p209 = scmp.eq.s32.totalorder %s19, 1
    %p210 = por %p208, %p209
    %p211 = scmp.ne.s32.totalorder %s200, %s201
    %p212 = scmp.eq.s32.totalorder %s19, 0
    %p213 = por %p211, %p212
    %p214 = scmp.ne.s32.totalorder %s200, %s201
    %p215 = scmp.eq.s32.totalorder %s20, 1
    %p216 = por %p214, %p215
    %p218 = scmp.ne.s32.totalorder %s201, %s217
    %p219 = scmp.eq.s32.totalorder %s20, 0
    %p220 = por %p218, %p219
    %p221 = scmp.le.s32.totalorder 1, %s14
    %p222 = scmp.lt.s32.totalorder %s14, 3
    %p223 = pnand %p221, %p222
    %p224 = pneg %p223
    // Predicated region
    $region9: #{my_model_forward.4} parent=5 // pred_check
      _
    $region10: #{my_model_forward.4} parent=5 // pred_check_branch
      %226 = sbr.rel (%p223) target = $region12
    $region11: #{my_model_forward.4} parent=5 // pred_region
      %s227 = ssub.s32 %s14, 1
      // Predicated region
      $region13: #{my_model_forward.4} parent=11 // pred_check
        %p228 = pneg %p61
      $region14: #{my_model_forward.4} parent=11 // pred_check_branch
        %230 = sbr.rel (%p228) target = $region16
      $region15: #{my_model_forward.4} parent=11 // pred_region
        _
      $region16: #{my_model_forward.4} parent=11 // pred_fallthru
        _
      // Predicated region
      $region17: #{my_model_forward.4} parent=11 // pred_check
        %p231 = pneg %p82
      $region18: #{my_model_forward.4} parent=11 // pred_check_branch
        %233 = sbr.rel (%p231) target = $region20
      $region19: #{my_model_forward.4} parent=11 // pred_region
        _
      $region20: #{my_model_forward.4} parent=11 // pred_fallthru
        _
      // Predicated region
      $region21: #{my_model_forward.4} parent=11 // pred_check
        %p234 = pneg %p103
      $region22: #{my_model_forward.4} parent=11 // pred_check_branch
        %236 = sbr.rel (%p234) target = $region24
      $region23: #{my_model_forward.4} parent=11 // pred_region
        _
      $region24: #{my_model_forward.4} parent=11 // pred_fallthru
        _
      // Predicated region
      $region25: #{my_model_forward.4} parent=11 // pred_check
        %p237 = pneg %p124
      $region26: #{my_model_forward.4} parent=11 // pred_check_branch
        %239 = sbr.rel (%p237) target = $region28
      $region27: #{my_model_forward.4} parent=11 // pred_region
        _
      $region28: #{my_model_forward.4} parent=11 // pred_fallthru
        _
      // Predicated region
      $region29: #{my_model_forward.4} parent=11 // pred_check
        %p240 = pneg %p145
      $region30: #{my_model_forward.4} parent=11 // pred_check_branch
        %242 = sbr.rel (%p240) target = $region32
      $region31: #{my_model_forward.4} parent=11 // pred_region
        _
      $region32: #{my_model_forward.4} parent=11 // pred_fallthru
        _
      // Predicated region
      $region33: #{my_model_forward.4} parent=11 // pred_check
        %p243 = pneg %p166
      $region34: #{my_model_forward.4} parent=11 // pred_check_branch
        %245 = sbr.rel (%p243) target = $region36
      $region35: #{my_model_forward.4} parent=11 // pred_region
        _
      $region36: #{my_model_forward.4} parent=11 // pred_fallthru
        _
      // Predicated region
      $region37: #{my_model_forward.4} parent=11 // pred_check
        %p246 = pneg %p187
      $region38: #{my_model_forward.4} parent=11 // pred_check_branch
        %248 = sbr.rel (%p246) target = $region40
      $region39: #{my_model_forward.4} parent=11 // pred_region
        _
      $region40: #{my_model_forward.4} parent=11 // pred_fallthru
        _
    $region12: #{my_model_forward.4} parent=5 // pred_fallthru
      _
    %p249 = scmp.lt.s32.totalorder %s14, 2
    // Predicated region
    $region41: #{my_model_forward.4} parent=5 // pred_check
      %p250 = pneg %p249
    $region42: #{my_model_forward.4} parent=5 // pred_check_branch
      %252 = sbr.rel (%p250) target = $region44
    $region43: #{my_model_forward.4} parent=5 // pred_region
      // Predicated region
      $region45: #{my_model_forward.4} parent=43 // pred_check
        %p253 = pneg %p34
      $region46: #{my_model_forward.4} parent=43 // pred_check_branch
        %255 = sbr.rel (%p253) target = $region48
      $region47: #{my_model_forward.4} parent=43 // pred_region
        %p256 = scmp.lt.s32.totalorder %s14, 1
        %s257 = scalar_select %p256, %s14, 1
        %s258 = smul.addr %s257, 8
        %s259 = smul.addr %s258, 4
        %s260 = scalar_lea.vmem %s0, %s259
      $region48: #{my_model_forward.4} parent=43 // pred_fallthru
        _
    $region44: #{my_model_forward.4} parent=5 // pred_fallthru
      _
    %p261 = scmp.le.s32.totalorder 1, %s14
    %p262 = scmp.lt.s32.totalorder %s14, 3
    %p263 = pnand %p261, %p262
    %p264 = pneg %p263
    // Predicated region
    $region49: #{my_model_forward.4} parent=5 // pred_check
      _
    $region50: #{my_model_forward.4} parent=5 // pred_check_branch
      %266 = sbr.rel (%p263) target = $region52
    $region51: #{my_model_forward.4} parent=5 // pred_region
      %s267 = ssub.s32 %s14, 1
      %p268 = scmp.lt.s32.totalorder %s19, 1
      %s269 = scalar_select %p268, %s19, 1
      %s270 = smul.addr %s269, 8
      %s271 = smul.addr %s270, 4
      %s272 = scalar_lea.vmem %s0, %s271
      %p273 = pneg %p40
      %p274 = pneg %p37
      %p275 = pneg %p61
      %p276 = pneg %p58
      %p277 = pneg %p82
      %p278 = pneg %p79
      %p279 = pneg %p103
      %p280 = pneg %p100
      %p281 = pneg %p124
      %p282 = pneg %p121
      %p283 = pneg %p145
      %p284 = pneg %p142
      %p285 = pneg %p166
      %p286 = pneg %p163
      %p287 = pneg %p187
      %p288 = pneg %p184
      %p289 = pneg %p213
      %p290 = pneg %p210
      %p291 = scmp.lt.s32.totalorder %s19, 1
      %s292 = scalar_select %p291, %s19, 1
      %s293 = smul.addr %s292, 4
      %s294 = scalar_lea.vmem %s8, %s293
      %p295 = scmp.lt.s32.totalorder %s19, 1
      %s296 = scalar_select %p295, %s19, 1
      %s297 = smul.addr %s296, 8
      %s298 = smul.addr %s297, 4
      %s299 = scalar_lea.vmem %s0, %s298
      %p300 = scmp.lt.s32.totalorder %s19, 1
      %s301 = scalar_select %p300, %s19, 1
      %s302 = smul.addr %s301, 4
      %s303 = scalar_lea.vmem %s8, %s302
      %v305 = vld [vmem:[%s299] sm:$0xf]
      %v306 = vld [vmem:[%s299 + $0x4] sm:$0xf]
      %v307 = vld [vmem:[%s299 + $0x8] sm:$0xf]
      %v308 = vld [vmem:[%s299 + $0xc] sm:$0xf]
      %v309 = vld [vmem:[%s299 + $0x10] sm:$0xf]
      %v310 = vld [vmem:[%s299 + $0x14] sm:$0xf]
      %v311 = vld [vmem:[%s299 + $0x18] sm:$0xf]
      %v312 = vld [vmem:[%s299 + $0x1c] sm:$0xf]
      %v313 = vld [vmem:[%s1] sm:$0xf]
      %v314 = vld [vmem:[%s1 + $0x4] sm:$0xf]
      %v315 = vld [vmem:[%s1 + $0x8] sm:$0xf]
      %v316 = vld [vmem:[%s1 + $0xc] sm:$0xf]
      %v317 = vld [vmem:[%s2] sm:$0xff]
      %v318 = vld [vmem:[%s2 + $0x8] sm:$0xff]
      %v319 = vld [vmem:[%s2 + $0x10] sm:$0xff]
      %v320 = vld [vmem:[%s2 + $0x18] sm:$0xff]
      %322 = vset.pattern.permute.xlu0 0
      %323 = vperm.xlu0 %322, %v317
      %v324 = vpop.permute.xlu0 %323
      %327 = vset.pattern.permute.xlu0 0
      %328 = vperm.xlu0 %327, %v318
      %v329 = vpop.permute.xlu0 %328
      %332 = vset.pattern.permute.xlu0 0
      %333 = vperm.xlu0 %332, %v319
      %v334 = vpop.permute.xlu0 %333
      %337 = vset.pattern.permute.xlu0 0
      %338 = vperm.xlu0 %337, %v320
      %v339 = vpop.permute.xlu0 %338
      %v345 = vunpack.c.l.b16 %v313
      %v346 = vunpack.c.l.b16 %v314
      %v347 = vunpack.c.l.b16 %v315
      %v348 = vunpack.c.l.b16 %v316
      %v349 = vpack.c.b16 %v346, %v345
      %v350 = vpack.c.b16 %v348, %v347
      %v359 = vunpack.c.l.b16 %v305
      %v360 = vunpack.c.l.b16 %v306
      %v361 = vunpack.c.l.b16 %v307
      %v362 = vunpack.c.l.b16 %v308
      %v363 = vunpack.c.l.b16 %v309
      %v364 = vunpack.c.l.b16 %v310
      %v365 = vunpack.c.l.b16 %v311
      %v366 = vunpack.c.l.b16 %v312
      %v367 = vpack.c.b16 %v360, %v359
      %v368 = vpack.c.b16 %v362, %v361
      %v369 = vpack.c.b16 %v364, %v363
      %v370 = vpack.c.b16 %v366, %v365
      %vm375 = vcmask 523264
      %v377 = vsel %vm375, %v349, 0
      %v380 = vsel %vm375, %v350, 0
      %382 = vmatpush.bf16.msra.mxu0 0
      %383 = vmatpush.bf16.msra.mxu0 0
      %384 = vmatpush.bf16.msra.mxu0 0
      %385 = vmatpush.bf16.msra.mxu0 0
      %386 = vmatpush.bf16.msra.mxu0 %v370
      %387 = vmatpush.bf16.msra.mxu0 %v369
      %388 = vmatpush.bf16.msra.mxu0 %v368
      %389 = vmatpush.bf16.msra.mxu0 %v367
      %390 = vmatmul.bf16.gmra.mxu0 %v377
      %v391 = vpop.f32.mrf.mxu0
      %v392 = vadd.f32 %v324, %v391
      %v393 = vpop.f32.mrf.mxu0
      %v394 = vadd.f32 %v329, %v393
      %395 = vmatmul.bf16.gmra.mxu0 %v380
      %v396 = vpop.f32.mrf.mxu0
      %v397 = vadd.f32 %v334, %v396
      %v398 = vpop.f32.mrf.mxu0
      %v399 = vadd.f32 %v339, %v398
      %400 = vdwg.mxu0
      %v401 = vmax.f32 %v392, 0.0
      %v402 = vmax.f32 %v394, 0.0
      %v403 = vmax.f32 %v397, 0.0
      %v404 = vmax.f32 %v399, 0.0
      %405 = vrot.lane.b32.xlu0 %v401, 9
      %v406 = vpop.permute.xlu0 %405
      %407 = vrot.lane.b32.xlu0 %v402, 9
      %v408 = vpop.permute.xlu0 %407
      %409 = vrot.lane.b32.xlu0 %v403, 9
      %v410 = vpop.permute.xlu0 %409
      %411 = vrot.lane.b32.xlu0 %v404, 9
      %v412 = vpop.permute.xlu0 %411
      %v413 = vld [vmem:[%s7] sm:$0x1]
      %v415 = vperm.slane %v413, 0
      %v417 = vmul.f32 %v406, %v415
      %v418 = vmul.f32 %v408, %v415
      %v419 = vmul.f32 %v410, %v415
      %v420 = vmul.f32 %v412, %v415
      %v421 = vld [vmem:[%s3] sm:$0xff]
      %v422 = vld [vmem:[%s3 + $0x8] sm:$0xff]
      %v423 = vld [vmem:[%s3 + $0x10] sm:$0xff]
      %v424 = vld [vmem:[%s3 + $0x18] sm:$0xff]
      %426 = vset.pattern.permute.xlu0 0
      %427 = vperm.xlu0 %426, %v421
      %v428 = vpop.permute.xlu0 %427
      %431 = vset.pattern.permute.xlu0 0
      %432 = vperm.xlu0 %431, %v422
      %v433 = vpop.permute.xlu0 %432
      %436 = vset.pattern.permute.xlu0 0
      %437 = vperm.xlu0 %436, %v423
      %v438 = vpop.permute.xlu0 %437
      %441 = vset.pattern.permute.xlu0 0
      %442 = vperm.xlu0 %441, %v424
      %v443 = vpop.permute.xlu0 %442
      %v445 = vmul.f32 %v417, %v428
      %v446 = vmul.f32 %v418, %v433
      %v447 = vmul.f32 %v419, %v438
      %v448 = vmul.f32 %v420, %v443
      %v449 = vadd.f32 %v445, 0.0
      %v450 = vadd.f32 %v446, 0.0
      %v451 = vadd.f32 %v447, 0.0
      %v452 = vadd.f32 %v448, 0.0
      %453 = vrot.lane.b32.xlu0 %v401, 8
      %v454 = vpop.permute.xlu0 %453
      %455 = vrot.lane.b32.xlu0 %v402, 8
      %v456 = vpop.permute.xlu0 %455
      %457 = vrot.lane.b32.xlu0 %v403, 8
      %v458 = vpop.permute.xlu0 %457
      %459 = vrot.lane.b32.xlu0 %v404, 8
      %v460 = vpop.permute.xlu0 %459
      %s461 = scalar_lea.vmem %s7, 1
      %v462 = vld [vmem:[%s461] sm:$0x1]
      %v464 = vperm.slane %v462, 0
      %v466 = vmul.f32 %v454, %v464
      %v467 = vmul.f32 %v456, %v464
      %v468 = vmul.f32 %v458, %v464
      %v469 = vmul.f32 %v460, %v464
      %s470 = scalar_lea.vmem %s3, 32
      %v471 = vld [vmem:[%s470] sm:$0xff]
      %v472 = vld [vmem:[%s470 + $0x8] sm:$0xff]
      %v473 = vld [vmem:[%s470 + $0x10] sm:$0xff]
      %v474 = vld [vmem:[%s470 + $0x18] sm:$0xff]
      %476 = vset.pattern.permute.xlu0 0
      %477 = vperm.xlu0 %476, %v471
      %v478 = vpop.permute.xlu0 %477
      %481 = vset.pattern.permute.xlu0 0
      %482 = vperm.xlu0 %481, %v472
      %v483 = vpop.permute.xlu0 %482
      %486 = vset.pattern.permute.xlu0 0
      %487 = vperm.xlu0 %486, %v473
      %v488 = vpop.permute.xlu0 %487
      %491 = vset.pattern.permute.xlu0 0
      %492 = vperm.xlu0 %491, %v474
      %v493 = vpop.permute.xlu0 %492
      %v495 = vmul.f32 %v466, %v478
      %v496 = vmul.f32 %v467, %v483
      %v497 = vmul.f32 %v468, %v488
      %v498 = vmul.f32 %v469, %v493
      %v499 = vadd.f32 %v449, %v495
      %v500 = vadd.f32 %v450, %v496
      %v501 = vadd.f32 %v451, %v497
      %v502 = vadd.f32 %v452, %v498
      %503 = vrot.lane.b32.xlu0 %v401, 7
      %v504 = vpop.permute.xlu0 %503
      %505 = vrot.lane.b32.xlu0 %v402, 7
      %v506 = vpop.permute.xlu0 %505
      %507 = vrot.lane.b32.xlu0 %v403, 7
      %v508 = vpop.permute.xlu0 %507
      %509 = vrot.lane.b32.xlu0 %v404, 7
      %v510 = vpop.permute.xlu0 %509
      %s511 = scalar_lea.vmem %s7, 2
      %v512 = vld [vmem:[%s511] sm:$0x1]
      %v514 = vperm.slane %v512, 0
      %v516 = vmul.f32 %v504, %v514
      %v517 = vmul.f32 %v506, %v514
      %v518 = vmul.f32 %v508, %v514
      %v519 = vmul.f32 %v510, %v514
      %s520 = scalar_lea.vmem %s3, 64
      %v521 = vld [vmem:[%s520] sm:$0xff]
      %v522 = vld [vmem:[%s520 + $0x8] sm:$0xff]
      %v523 = vld [vmem:[%s520 + $0x10] sm:$0xff]
      %v524 = vld [vmem:[%s520 + $0x18] sm:$0xff]
      %526 = vset.pattern.permute.xlu0 0
      %527 = vperm.xlu0 %526, %v521
      %v528 = vpop.permute.xlu0 %527
      %531 = vset.pattern.permute.xlu0 0
      %532 = vperm.xlu0 %531, %v522
      %v533 = vpop.permute.xlu0 %532
      %536 = vset.pattern.permute.xlu0 0
      %537 = vperm.xlu0 %536, %v523
      %v538 = vpop.permute.xlu0 %537
      %541 = vset.pattern.permute.xlu0 0
      %542 = vperm.xlu0 %541, %v524
      %v543 = vpop.permute.xlu0 %542
      %v545 = vmul.f32 %v516, %v528
      %v546 = vmul.f32 %v517, %v533
      %v547 = vmul.f32 %v518, %v538
      %v548 = vmul.f32 %v519, %v543
      %v549 = vadd.f32 %v499, %v545
      %v550 = vadd.f32 %v500, %v546
      %v551 = vadd.f32 %v501, %v547
      %v552 = vadd.f32 %v502, %v548
      %553 = vrot.lane.b32.xlu0 %v401, 1
      %v554 = vpop.permute.xlu0 %553
      %555 = vrot.lane.b32.xlu0 %v402, 1
      %v556 = vpop.permute.xlu0 %555
      %557 = vrot.lane.b32.xlu0 %v403, 1
      %v558 = vpop.permute.xlu0 %557
      %559 = vrot.lane.b32.xlu0 %v404, 1
      %v560 = vpop.permute.xlu0 %559
      %s561 = scalar_lea.vmem %s7, 3
      %v562 = vld [vmem:[%s561] sm:$0x1]
      %v564 = vperm.slane %v562, 0
      %v566 = vmul.f32 %v554, %v564
      %v567 = vmul.f32 %v556, %v564
      %v568 = vmul.f32 %v558, %v564
      %v569 = vmul.f32 %v560, %v564
      %s570 = scalar_lea.vmem %s3, 96
      %v571 = vld [vmem:[%s570] sm:$0xff]
      %v572 = vld [vmem:[%s570 + $0x8] sm:$0xff]
      %v573 = vld [vmem:[%s570 + $0x10] sm:$0xff]
      %v574 = vld [vmem:[%s570 + $0x18] sm:$0xff]
      %576 = vset.pattern.permute.xlu0 0
      %577 = vperm.xlu0 %576, %v571
      %v578 = vpop.permute.xlu0 %577
      %581 = vset.pattern.permute.xlu0 0
      %582 = vperm.xlu0 %581, %v572
      %v583 = vpop.permute.xlu0 %582
      %586 = vset.pattern.permute.xlu0 0
      %587 = vperm.xlu0 %586, %v573
      %v588 = vpop.permute.xlu0 %587
      %591 = vset.pattern.permute.xlu0 0
      %592 = vperm.xlu0 %591, %v574
      %v593 = vpop.permute.xlu0 %592
      %v595 = vmul.f32 %v566, %v578
      %v596 = vmul.f32 %v567, %v583
      %v597 = vmul.f32 %v568, %v588
      %v598 = vmul.f32 %v569, %v593
      %v599 = vadd.f32 %v549, %v595
      %v600 = vadd.f32 %v550, %v596
      %v601 = vadd.f32 %v551, %v597
      %v602 = vadd.f32 %v552, %v598
      %s603 = scalar_lea.vmem %s7, 4
      %v604 = vld [vmem:[%s603] sm:$0x1]
      %v606 = vperm.slane %v604, 0
      %v608 = vmul.f32 %v401, %v606
      %v609 = vmul.f32 %v402, %v606
      %v610 = vmul.f32 %v403, %v606
      %v611 = vmul.f32 %v404, %v606
      %s612 = scalar_lea.vmem %s3, 128
      %v613 = vld [vmem:[%s612] sm:$0xff]
      %v614 = vld [vmem:[%s612 + $0x8] sm:$0xff]
      %v615 = vld [vmem:[%s612 + $0x10] sm:$0xff]
      %v616 = vld [vmem:[%s612 + $0x18] sm:$0xff]
      %618 = vset.pattern.permute.xlu0 0
      %619 = vperm.xlu0 %618, %v613
      %v620 = vpop.permute.xlu0 %619
      %623 = vset.pattern.permute.xlu0 0
      %624 = vperm.xlu0 %623, %v614
      %v625 = vpop.permute.xlu0 %624
      %628 = vset.pattern.permute.xlu0 0
      %629 = vperm.xlu0 %628, %v615
      %v630 = vpop.permute.xlu0 %629
      %633 = vset.pattern.permute.xlu0 0
      %634 = vperm.xlu0 %633, %v616
      %v635 = vpop.permute.xlu0 %634
      %v637 = vmul.f32 %v608, %v620
      %v638 = vmul.f32 %v609, %v625
      %v639 = vmul.f32 %v610, %v630
      %v640 = vmul.f32 %v611, %v635
      %v641 = vadd.f32 %v599, %v637
      %v642 = vadd.f32 %v600, %v638
      %v643 = vadd.f32 %v601, %v639
      %v644 = vadd.f32 %v602, %v640
      %645 = vrot.lane.b32.xlu0 %v401, 127
      %v646 = vpop.permute.xlu0 %645
      %647 = vrot.lane.b32.xlu0 %v402, 127
      %v648 = vpop.permute.xlu0 %647
      %649 = vrot.lane.b32.xlu0 %v403, 127
      %v650 = vpop.permute.xlu0 %649
      %651 = vrot.lane.b32.xlu0 %v404, 127
      %v652 = vpop.permute.xlu0 %651
      %s653 = scalar_lea.vmem %s7, 5
      %v654 = vld [vmem:[%s653] sm:$0x1]
      %v656 = vperm.slane %v654, 0
      %v658 = vmul.f32 %v646, %v656
      %v659 = vmul.f32 %v648, %v656
      %v660 = vmul.f32 %v650, %v656
      %v661 = vmul.f32 %v652, %v656
      %s662 = scalar_lea.vmem %s3, 160
      %v663 = vld [vmem:[%s662] sm:$0xff]
      %v664 = vld [vmem:[%s662 + $0x8] sm:$0xff]
      %v665 = vld [vmem:[%s662 + $0x10] sm:$0xff]
      %v666 = vld [vmem:[%s662 + $0x18] sm:$0xff]
      %668 = vset.pattern.permute.xlu0 0
      %669 = vperm.xlu0 %668, %v663
      %v670 = vpop.permute.xlu0 %669
      %673 = vset.pattern.permute.xlu0 0
      %674 = vperm.xlu0 %673, %v664
      %v675 = vpop.permute.xlu0 %674
      %678 = vset.pattern.permute.xlu0 0
      %679 = vperm.xlu0 %678, %v665
      %v680 = vpop.permute.xlu0 %679
      %683 = vset.pattern.permute.xlu0 0
      %684 = vperm.xlu0 %683, %v666
      %v685 = vpop.permute.xlu0 %684
      %v687 = vmul.f32 %v658, %v670
      %v688 = vmul.f32 %v659, %v675
      %v689 = vmul.f32 %v660, %v680
      %v690 = vmul.f32 %v661, %v685
      %v691 = vadd.f32 %v641, %v687
      %v692 = vadd.f32 %v642, %v688
      %v693 = vadd.f32 %v643, %v689
      %v694 = vadd.f32 %v644, %v690
      %695 = vrot.lane.b32.xlu0 %v401, 121
      %v696 = vpop.permute.xlu0 %695
      %697 = vrot.lane.b32.xlu0 %v402, 121
      %v698 = vpop.permute.xlu0 %697
      %699 = vrot.lane.b32.xlu0 %v403, 121
      %v700 = vpop.permute.xlu0 %699
      %701 = vrot.lane.b32.xlu0 %v404, 121
      %v702 = vpop.permute.xlu0 %701
      %s703 = scalar_lea.vmem %s7, 6
      %v704 = vld [vmem:[%s703] sm:$0x1]
      %v706 = vperm.slane %v704, 0
      %v708 = vmul.f32 %v696, %v706
      %v709 = vmul.f32 %v698, %v706
      %v710 = vmul.f32 %v700, %v706
      %v711 = vmul.f32 %v702, %v706
      %s712 = scalar_lea.vmem %s3, 192
      %v713 = vld [vmem:[%s712] sm:$0xff]
      %v714 = vld [vmem:[%s712 + $0x8] sm:$0xff]
      %v715 = vld [vmem:[%s712 + $0x10] sm:$0xff]
      %v716 = vld [vmem:[%s712 + $0x18] sm:$0xff]
      %718 = vset.pattern.permute.xlu0 0
      %719 = vperm.xlu0 %718, %v713
      %v720 = vpop.permute.xlu0 %719
      %723 = vset.pattern.permute.xlu0 0
      %724 = vperm.xlu0 %723, %v714
      %v725 = vpop.permute.xlu0 %724
      %728 = vset.pattern.permute.xlu0 0
      %729 = vperm.xlu0 %728, %v715
      %v730 = vpop.permute.xlu0 %729
      %733 = vset.pattern.permute.xlu0 0
      %734 = vperm.xlu0 %733, %v716
      %v735 = vpop.permute.xlu0 %734
      %v737 = vmul.f32 %v708, %v720
      %v738 = vmul.f32 %v709, %v725
      %v739 = vmul.f32 %v710, %v730
      %v740 = vmul.f32 %v711, %v735
      %v741 = vadd.f32 %v691, %v737
      %v742 = vadd.f32 %v692, %v738
      %v743 = vadd.f32 %v693, %v739
      %v744 = vadd.f32 %v694, %v740
      %745 = vrot.lane.b32.xlu0 %v401, 120
      %v746 = vpop.permute.xlu0 %745
      %747 = vrot.lane.b32.xlu0 %v402, 120
      %v748 = vpop.permute.xlu0 %747
      %749 = vrot.lane.b32.xlu0 %v403, 120
      %v750 = vpop.permute.xlu0 %749
      %751 = vrot.lane.b32.xlu0 %v404, 120
      %v752 = vpop.permute.xlu0 %751
      %s753 = scalar_lea.vmem %s7, 7
      %v754 = vld [vmem:[%s753] sm:$0x1]
      %v756 = vperm.slane %v754, 0
      %v758 = vmul.f32 %v746, %v756
      %v759 = vmul.f32 %v748, %v756
      %v760 = vmul.f32 %v750, %v756
      %v761 = vmul.f32 %v752, %v756
      %s762 = scalar_lea.vmem %s3, 224
      %v763 = vld [vmem:[%s762] sm:$0xff]
      %v764 = vld [vmem:[%s762 + $0x8] sm:$0xff]
      %v765 = vld [vmem:[%s762 + $0x10] sm:$0xff]
      %v766 = vld [vmem:[%s762 + $0x18] sm:$0xff]
      %768 = vset.pattern.permute.xlu0 0
      %769 = vperm.xlu0 %768, %v763
      %v770 = vpop.permute.xlu0 %769
      %773 = vset.pattern.permute.xlu0 0
      %774 = vperm.xlu0 %773, %v764
      %v775 = vpop.permute.xlu0 %774
      %778 = vset.pattern.permute.xlu0 0
      %779 = vperm.xlu0 %778, %v765
      %v780 = vpop.permute.xlu0 %779
      %783 = vset.pattern.permute.xlu0 0
      %784 = vperm.xlu0 %783, %v766
      %v785 = vpop.permute.xlu0 %784
      %v787 = vmul.f32 %v758, %v770
      %v788 = vmul.f32 %v759, %v775
      %v789 = vmul.f32 %v760, %v780
      %v790 = vmul.f32 %v761, %v785
      %v791 = vadd.f32 %v741, %v787
      %v792 = vadd.f32 %v742, %v788
      %v793 = vadd.f32 %v743, %v789
      %v794 = vadd.f32 %v744, %v790
      %795 = vrot.lane.b32.xlu0 %v401, 119
      %v796 = vpop.permute.xlu0 %795
      %797 = vrot.lane.b32.xlu0 %v402, 119
      %v798 = vpop.permute.xlu0 %797
      %799 = vrot.lane.b32.xlu0 %v403, 119
      %v800 = vpop.permute.xlu0 %799
      %801 = vrot.lane.b32.xlu0 %v404, 119
      %v802 = vpop.permute.xlu0 %801
      %s803 = scalar_lea.vmem %s7, 8
      %v804 = vld [vmem:[%s803] sm:$0x1]
      %v806 = vperm.slane %v804, 0
      %v808 = vmul.f32 %v796, %v806
      %v809 = vmul.f32 %v798, %v806
      %v810 = vmul.f32 %v800, %v806
      %v811 = vmul.f32 %v802, %v806
      %s812 = scalar_lea.vmem %s3, 256
      %v813 = vld [vmem:[%s812] sm:$0xff]
      %v814 = vld [vmem:[%s812 + $0x8] sm:$0xff]
      %v815 = vld [vmem:[%s812 + $0x10] sm:$0xff]
      %v816 = vld [vmem:[%s812 + $0x18] sm:$0xff]
      %818 = vset.pattern.permute.xlu0 0
      %819 = vperm.xlu0 %818, %v813
      %v820 = vpop.permute.xlu0 %819
      %823 = vset.pattern.permute.xlu0 0
      %824 = vperm.xlu0 %823, %v814
      %v825 = vpop.permute.xlu0 %824
      %828 = vset.pattern.permute.xlu0 0
      %829 = vperm.xlu0 %828, %v815
      %v830 = vpop.permute.xlu0 %829
      %833 = vset.pattern.permute.xlu0 0
      %834 = vperm.xlu0 %833, %v816
      %v835 = vpop.permute.xlu0 %834
      %v837 = vmul.f32 %v808, %v820
      %v838 = vmul.f32 %v809, %v825
      %v839 = vmul.f32 %v810, %v830
      %v840 = vmul.f32 %v811, %v835
      %v841 = vadd.f32 %v791, %v837
      %v842 = vadd.f32 %v792, %v838
      %v843 = vadd.f32 %v793, %v839
      %v844 = vadd.f32 %v794, %v840
      %v845 = vld [vmem:[%s4] sm:$0xff]
      %v846 = vld [vmem:[%s4 + $0x8] sm:$0xff]
      %v847 = vld [vmem:[%s4 + $0x10] sm:$0xff]
      %v848 = vld [vmem:[%s4 + $0x18] sm:$0xff]
      %850 = vset.pattern.permute.xlu0 0
      %851 = vperm.xlu0 %850, %v845
      %v852 = vpop.permute.xlu0 %851
      %855 = vset.pattern.permute.xlu0 0
      %856 = vperm.xlu0 %855, %v846
      %v857 = vpop.permute.xlu0 %856
      %860 = vset.pattern.permute.xlu0 0
      %861 = vperm.xlu0 %860, %v847
      %v862 = vpop.permute.xlu0 %861
      %865 = vset.pattern.permute.xlu0 0
      %866 = vperm.xlu0 %865, %v848
      %v867 = vpop.permute.xlu0 %866
      %v869 = vadd.f32 %v841, %v852
      %v870 = vadd.f32 %v842, %v857
      %v871 = vadd.f32 %v843, %v862
      %v872 = vadd.f32 %v844, %v867
      %v873 = vmax.f32 %v869, 0.0
      %v874 = vmax.f32 %v870, 0.0
      %v875 = vmax.f32 %v871, 0.0
      %v876 = vmax.f32 %v872, 0.0
      %v877 = vld [vmem:[%s5] sm:$0x3]
      %v878 = vpack.c.bf16 %v874, %v873
      %v879 = vpack.c.bf16 %v876, %v875
      %v880 = vld [vmem:[%s6] sm:$0x7]
      %882 = vset.pattern.permute.xlu0 0
      %883 = vperm.xlu0 %882, %v880
      %v884 = vpop.permute.xlu0 %883
      %vm886 = vcmask 261120
      %v888 = vsel %vm886, %v877, 0
      %890 = vmatpush.bf16.msra.mxu0 0
      %891 = vmatpush.bf16.msra.mxu0 0
      %892 = vmatpush.bf16.msra.mxu0 0
      %893 = vmatpush.bf16.msra.mxu0 0
      %894 = vmatpush.bf16.msra.mxu0 0
      %895 = vmatpush.bf16.msra.mxu0 0
      %896 = vmatpush.bf16.msra.mxu0 %v879
      %897 = vmatpush.bf16.msra.mxu0 %v878
      %898 = vmatmul.bf16.gmra.mxu0 %v888
      %v899 = vpop.f32.mrf.mxu0
      %v900 = vadd.f32 %v884, %v899
      %v901 = vpop.f32.mrf.mxu0
      %902 = vdwg.mxu0
      %903 = vst [vmem:[%s303] sm:$0x7] %v900
      %p904 = scmp.lt.s32.totalorder %s19, 1
      %s905 = scalar_select %p904, %s19, 1
      %s906 = smul.addr %s905, 4
      %s907 = scalar_lea.vmem %s8, %s906
      // Predicated region
      $region53: #{my_model_forward.4} parent=51 // pred_check
        %p908 = pneg %p210
      $region54: #{my_model_forward.4} parent=51 // pred_check_branch
        %910 = sbr.rel (%p908) target = $region56
      $region55: #{my_model_forward.4} parent=51 // pred_region
        _
      $region56: #{my_model_forward.4} parent=51 // pred_fallthru
        _
    $region52: #{my_model_forward.4} parent=5 // pred_fallthru
      _
    %p911 = scmp.le.s32.totalorder 2, %s14
    // Predicated region
    $region57: #{my_model_forward.4} parent=5 // pred_check
      %p912 = pneg %p911
    $region58: #{my_model_forward.4} parent=5 // pred_check_branch
      %914 = sbr.rel (%p912) target = $region60
    $region59: #{my_model_forward.4} parent=5 // pred_region
      %s915 = ssub.s32 %s14, 2
      // Predicated region
      $region61: #{my_model_forward.4} parent=59 // pred_check
        %p916 = pneg %p216
      $region62: #{my_model_forward.4} parent=59 // pred_check_branch
        %918 = sbr.rel (%p916) target = $region64
      $region63: #{my_model_forward.4} parent=59 // pred_region
        %p919 = scmp.lt.s32.totalorder %s20, 1
        %s920 = scalar_select %p919, %s20, 1
        %s921 = smul.addr %s920, 4
        %s922 = scalar_lea.vmem %s8, %s921
      $region64: #{my_model_forward.4} parent=59 // pred_fallthru
        _
    $region60: #{my_model_forward.4} parent=5 // pred_fallthru
      _
  $region6: #{my_model_forward.4} parent=0 // loop_footer
    %s18 = sadd.s32 1, %s14
  $region7: #{my_model_forward.4} parent=0 // loop_footer_branch
    %13 = sbr.rel target = $region3
  $region8: #{my_model_forward.4} parent=0 // loop_exit
    _

</llo_original>
